<compile_context>
chip_gen: v6e
topology: v6e:2x2x1
jax: 0.10.0
libtpu: 0.0.40
codegen_flags: <defaults>
</compile_context>

<pallas_src>
import functools

import numpy as np

import jax
import jax.numpy as jnp
from jax import lax
from jax.experimental import pallas as pl
from jax.experimental.pallas import tpu as pltpu


_VMEM_LIMIT = 48 * 1024 * 1024  # leave compiler headroom on v7x (64 MiB physical)


def _pick_tile(dim, target, multiple):
    """Largest tile <= target that divides `dim` and is a multiple of `multiple`.
    Falls back to the full dim (always a legal BlockSpec block)."""
    if dim <= target:
        return dim
    t = (target // multiple) * multiple
    while t >= multiple:
        if dim % t == 0:
            return t
        t -= multiple
    return dim


# ---------------------------------------------------------------------------
# One-time parameter preprocessing (hoisted out of the per-call forward).
# ---------------------------------------------------------------------------
def prepare_params(wq_t, wk_t, wv_t, wo_t, bo, num_heads):
    """w*_t are (in=E, out=E). Returns bf16 kernel-layout weights."""
    E = wq_t.shape[0]
    D = E // num_heads
    w3 = jnp.stack([wq_t, wk_t, wv_t], axis=0).astype(jnp.bfloat16)   # (3, E, E)
    wo_h = wo_t.reshape(num_heads, D, E).astype(jnp.bfloat16)          # (H, D, E)
    bo_p = bo.reshape(1, E).astype(jnp.float32)                        # (1, E)
    return w3, wo_h, bo_p


# ---------------------------------------------------------------------------
# Kernel 1: fused QKV projection, head-major output  (B, 3H, S, D)
# ---------------------------------------------------------------------------
def _qkv_heads_kernel(x_ref, w_ref, out_ref, *, head_dim):
    # x block (1, ts, E) f32; w block (1, E, E) bf16; out block (1, H, ts, D) bf16
    xb = x_ref[0].astype(jnp.bfloat16)  # in-kernel cast: hides under the MXU matmul
    y = jnp.dot(xb, w_ref[0], preferred_element_type=jnp.float32).astype(out_ref.dtype)
    num_heads = out_ref.shape[1]
    for h in range(num_heads):  # static unroll: per-head slab stores (no XLA transpose)
        out_ref[0, h] = y[:, h * head_dim:(h + 1) * head_dim]


def _qkv_proj_heads(x, w3, num_heads, head_dim):
    B, S, E = x.shape
    ts = _pick_tile(S, 512, 16)
    kernel = functools.partial(_qkv_heads_kernel, head_dim=head_dim)
    return pl.pallas_call(
        kernel,
        out_shape=jax.ShapeDtypeStruct((B, 3 * num_heads, S, head_dim), jnp.bfloat16),
        grid=(B, 3, S // ts),  # which-of-{q,k,v} middle: each (E,E) slab fetched 3B times
        in_specs=[
            pl.BlockSpec((1, ts, E), lambda b, c, si: (b, si, 0)),
            pl.BlockSpec((1, E, E), lambda b, c, si: (c, 0, 0)),
        ],
        out_specs=pl.BlockSpec((1, num_heads, ts, head_dim),
                               lambda b, c, si: (b, c, si, 0)),
        compiler_params=pltpu.CompilerParams(
            dimension_semantics=("parallel", "parallel", "parallel"),
            vmem_limit_bytes=_VMEM_LIMIT,
        ),
    )(x, w3)


# ---------------------------------------------------------------------------
# Kernel 2: flash-style causal attention over a triangular (qi, ki) grid
# ---------------------------------------------------------------------------
def _flash_attn_kernel(qi_tab, ki_tab, q_ref, k_ref, v_ref, o_ref,
                       m_ref, l_ref, acc_ref):
    t = pl.program_id(2)
    qi = qi_tab[t]
    ki = ki_tab[t]

    @pl.when(ki == 0)
    def _init():
        m_ref[...] = jnp.full(m_ref.shape, -jnp.inf, dtype=m_ref.dtype)
        l_ref[...] = jnp.zeros(l_ref.shape, dtype=l_ref.dtype)
        acc_ref[...] = jnp.zeros(acc_ref.shape, dtype=acc_ref.dtype)

    def _accumulate(masked):
        q = q_ref[0, 0]  # (tq, D) bf16
        k = k_ref[0, 0]  # (tk, D) bf16
        v = v_ref[0, 0]  # (tk, D) bf16
        # NOTE: GPT-Neo applies NO 1/sqrt(head_dim) scaling.
        s = lax.dot_general(
            q, k, (((1,), (1,)), ((), ())), preferred_element_type=jnp.float32
        )  # (tq, tk) f32
        if masked:
            # Diagonal tile only (tq == tk, qi == ki): local row >= col mask,
            # fill = finfo(float32).min per module semantics.
            tq, tk = s.shape
            row = lax.broadcasted_iota(jnp.int32, (tq, tk), 0)
            col = lax.broadcasted_iota(jnp.int32, (tq, tk), 1)
            s = jnp.where(row >= col, s, jnp.finfo(jnp.float32).min)

        # Online softmax (f32).  TODO(synk): on v6e/v7x the exp could run in bf16
        # (EUP) for ~2x; kept f32 for portability (v5e) and closer f32 parity.
        m_prev = m_ref[...]
        m_new = jnp.maximum(m_prev, jnp.max(s, axis=-1, keepdims=True))
        alpha = jnp.exp(m_prev - m_new)
        p = jnp.exp(s - m_new)
        l_ref[...] = alpha * l_ref[...] + jnp.sum(p, axis=-1, keepdims=True)
        acc_ref[...] = alpha * acc_ref[...] + jnp.dot(
            p.astype(v.dtype), v, preferred_element_type=jnp.float32)
        m_ref[...] = m_new

    @pl.when(ki < qi)
    def _off_diag():          # below the diagonal: no mask needed
        _accumulate(masked=False)

    @pl.when(ki == qi)
    def _diag_and_finalize():  # diagonal tile is the last contributor for this qi
        _accumulate(masked=True)
        inv_l = pl.reciprocal(l_ref[...], approx=True)  # EUP, nearly free
        o_ref[0, 0] = (acc_ref[...] * inv_l).astype(o_ref.dtype)


def _flash_attention(qkv_heads, num_heads):
    """qkv_heads: (B, 3H, S, D) bf16 with rows [0,H)=q, [H,2H)=k, [2H,3H)=v."""
    B, _, S, D = qkv_heads.shape
    H = num_heads
    tq = _pick_tile(S, 512, 16)   # bf16-aware sublane multiple
    nq = S // tq
    # Flattened lower-triangular (qi, ki) pairs: no dead grid steps.
    qi_of = np.array([qi for qi in range(nq) for _ in range(qi + 1)], dtype=np.int32)
    ki_of = np.array([ki for qi in range(nq) for ki in range(qi + 1)], dtype=np.int32)
    T = int(qi_of.shape[0])

    q_map = lambda b, h, t, qi_t, ki_t: (b, h, qi_t[t], 0)
    k_map = lambda b, h, t, qi_t, ki_t: (b, h + H, ki_t[t], 0)
    v_map = lambda b, h, t, qi_t, ki_t: (b, h + 2 * H, ki_t[t], 0)
    o_map = lambda b, h, t, qi_t, ki_t: (b, h, qi_t[t], 0)

    # TODO(synk): for D=64 configs, pack two adjacent heads per output block to
    # make the attention output lane-dense (128-wide stores).
    return pl.pallas_call(
        _flash_attn_kernel,
        out_shape=jax.ShapeDtypeStruct((B, H, S, D), qkv_heads.dtype),
        grid_spec=pltpu.PrefetchScalarGridSpec(
            num_scalar_prefetch=2,
            grid=(B, H, T),
            in_specs=[
                pl.BlockSpec((1, 1, tq, D), q_map),
                pl.BlockSpec((1, 1, tq, D), k_map),
                pl.BlockSpec((1, 1, tq, D), v_map),
            ],
            out_specs=pl.BlockSpec((1, 1, tq, D), o_map),
            scratch_shapes=[
                pltpu.VMEM((tq, 1), jnp.float32),  # running max
                pltpu.VMEM((tq, 1), jnp.float32),  # running denom
                pltpu.VMEM((tq, D), jnp.float32),  # unnormalized ctx accumulator
            ],
        ),
        compiler_params=pltpu.CompilerParams(
            dimension_semantics=("parallel", "parallel", "arbitrary"),
            vmem_limit_bytes=_VMEM_LIMIT,
        ),
    )(jnp.asarray(qi_of), jnp.asarray(ki_of), qkv_heads, qkv_heads, qkv_heads)


# ---------------------------------------------------------------------------
# Kernel 3: output projection over head-major ctx:  out = sum_h ctx_h @ Wo_h + bo
# ---------------------------------------------------------------------------
def _out_proj_kernel(ctx_ref, w_ref, b_ref, out_ref, acc_ref):
    h = pl.program_id(2)

    @pl.when(h == 0)
    def _init():
        acc_ref[...] = jnp.zeros(acc_ref.shape, dtype=acc_ref.dtype)

    acc_ref[...] += jnp.dot(ctx_ref[0, 0], w_ref[0],
                            preferred_element_type=jnp.float32)

    @pl.when(h == pl.num_programs(2) - 1)
    def _finalize():
        out_ref[0] = (acc_ref[...] + b_ref[...]).astype(out_ref.dtype)


def _out_proj(ctx, wo_h, bo):
    """ctx: (B, H, S, D) bf16; wo_h: (H, D, E) bf16; bo: (1, E) f32."""
    B, H, S, D = ctx.shape
    E = wo_h.shape[-1]
    ts = _pick_tile(S, 512, 16)
    return pl.pallas_call(
        _out_proj_kernel,
        out_shape=jax.ShapeDtypeStruct((B, S, E), jnp.float32),
        grid=(B, S // ts, H),  # H innermost: reduction over heads, no merge transpose
        in_specs=[
            pl.BlockSpec((1, 1, ts, D), lambda b, si, h: (b, h, si, 0)),
            pl.BlockSpec((1, D, E), lambda b, si, h: (h, 0, 0)),
            pl.BlockSpec((1, E), lambda b, si, h: (0, 0)),
        ],
        out_specs=pl.BlockSpec((1, ts, E), lambda b, si, h: (b, si, 0)),
        scratch_shapes=[pltpu.VMEM((ts, E), jnp.float32)],
        compiler_params=pltpu.CompilerParams(
            dimension_semantics=("parallel", "parallel", "arbitrary"),
            vmem_limit_bytes=_VMEM_LIMIT,
        ),
    )(ctx, wo_h, bo)


# ---------------------------------------------------------------------------
# Full forward
# ---------------------------------------------------------------------------
@functools.partial(jax.jit, static_argnames=("num_heads",))
def gpt_neo_self_attention(x, w3, wo_h, bo, *, num_heads):
    """x: (B, S, E) f32.  w3: (3, E, E) bf16.  wo_h: (H, D, E) bf16.  bo: (1, E) f32."""
    B, S, E = x.shape
    D = E // num_heads
    qkv = _qkv_proj_heads(x, w3, num_heads, D)   # (B, 3H, S, D) bf16, head-major
    ctx = _flash_attention(qkv, num_heads)       # (B, H, S, D) bf16
    out = _out_proj(ctx, wo_h, bo)               # (B, S, E) f32
    # TODO(synk): attn_dropout / resid_dropout are identity in eval mode;
    # attention_mask / head_mask / layer_past / use_cache / output_attentions
    # (defaults None/False) and attention_type='local' windowing are not modeled.
    return out


def _reference(x, wq_t, wk_t, wv_t, wo_t, bo, num_heads):
    """Plain-JAX f32 mirror of the PyTorch forward (eval mode) for validation."""
    B, S, E = x.shape
    D = E // num_heads
    q = x @ wq_t
    k = x @ wk_t
    v = x @ wv_t

    def split(t):  # (B, S, E) -> (B, H, S, D)
        return t.reshape(B, S, num_heads, D).transpose(0, 2, 1, 3)

    q, k, v = split(q), split(k), split(v)
    scores = jnp.einsum("bhqd,bhkd->bhqk", q, k)
    causal = jnp.tril(jnp.ones((S, S), dtype=bool))[None, None]
    scores = jnp.where(causal, scores, jnp.finfo(jnp.float32).min)
    p = jax.nn.softmax(scores, axis=-1)
    ctx = jnp.einsum("bhqk,bhkd->bhqd", p, v)
    ctx = ctx.transpose(0, 2, 1, 3).reshape(B, S, E)
    return ctx @ wo_t + bo


if __name__ == "__main__":
    # Small config consistent with the module: hidden_size=32, num_heads=4,
    # head_dim=8, batch=2, seq=8 (attention_type='global').
    B, S, E, H = 2, 8, 32, 4

    key = jax.random.PRNGKey(0)
    kx, kq, kk, kv_, ko, kb = jax.random.split(key, 6)
    x = jax.random.normal(kx, (B, S, E), dtype=jnp.float32)
    # PyTorch Linear weights are (out, in); initialize in that convention then
    # transpose to (in, out) for the kernels.
    wq = 0.05 * jax.random.normal(kq, (E, E), dtype=jnp.float32)
    wk = 0.05 * jax.random.normal(kk, (E, E), dtype=jnp.float32)
    wv = 0.05 * jax.random.normal(kv_, (E, E), dtype=jnp.float32)
    wo = 0.05 * jax.random.normal(ko, (E, E), dtype=jnp.float32)
    bo = 0.05 * jax.random.normal(kb, (1, E), dtype=jnp.float32)

    wq_t, wk_t, wv_t, wo_t = wq.T, wk.T, wv.T, wo.T

    # One-time parameter preprocessing (hoisted out of the jitted forward).
    w3, wo_h, bo_p = prepare_params(wq_t, wk_t, wv_t, wo_t, bo, H)

    out = gpt_neo_self_attention(x, w3, wo_h, bo_p, num_heads=H)
    out = jax.block_until_ready(out)

    ref = _reference(x, wq_t, wk_t, wv_t, wo_t, bo, H)
    assert out.shape == (B, S, E)
    err = float(jnp.max(jnp.abs(out - ref)))
    scale = float(jnp.max(jnp.abs(ref))) + 1e-6
    # bf16 matmuls (f32 accumulation / f32 softmax): relative tolerance check.
    assert err <= 3e-2 * scale + 1e-5, f"mismatch vs reference: err={err}, scale={scale}"

    print("KERNEL_OK")
</pallas_src>

<mosaic_0001>
module attributes {stable_mosaic.version = 11 : i64} {
  func.func @_qkv_heads_kernel(%arg0: i32, %arg1: i32, %arg2: i32, %arg3: memref<1x8x32xf32, #tpu.memory_space<vmem>>, %arg4: memref<1x32x32xbf16, #tpu.memory_space<vmem>>, %arg5: memref<1x4x8x8xbf16, #tpu.memory_space<vmem>>) attributes {dimension_semantics = [#tpu.dimension_semantics<parallel>, #tpu.dimension_semantics<parallel>, #tpu.dimension_semantics<parallel>], iteration_bounds = array<i64: 2, 3, 1>, scalar_prefetch = 0 : i64, scratch_operands = 0 : i64, tpu.core_type = #tpu.core_type<tc>, window_params = [{transform_indices = @transform_0, window_bounds = array<i64: 1, 8, 32>}, {transform_indices = @transform_1, window_bounds = array<i64: 1, 32, 32>}, {transform_indices = @transform_2, window_bounds = array<i64: 1, 4, 8, 8>}]} {
    %c0 = arith.constant 0 : index
    %c0_0 = arith.constant 0 : index
    %c0_1 = arith.constant 0 : index
    %0 = vector.load %arg3[%c0, %c0_0, %c0_1] : memref<1x8x32xf32, #tpu.memory_space<vmem>>, vector<1x8x32xf32>
    %1 = vector.shape_cast %0 : vector<1x8x32xf32> to vector<8x32xf32>
    %2 = arith.truncf %1 : vector<8x32xf32> to vector<8x32xbf16>
    %c0_2 = arith.constant 0 : index
    %c0_3 = arith.constant 0 : index
    %c0_4 = arith.constant 0 : index
    %3 = vector.load %arg4[%c0_2, %c0_3, %c0_4] : memref<1x32x32xbf16, #tpu.memory_space<vmem>>, vector<1x32x32xbf16>
    %4 = vector.shape_cast %3 : vector<1x32x32xbf16> to vector<32x32xbf16>
    %cst = arith.constant dense<0.000000e+00> : vector<8x32xf32>
    %5 = tpu.matmul %2, %4, %cst {dimension_numbers = #tpu.dot_dimension_numbers<[1], [0], [0], [1], [0, 0, 1, 1], [], []>} : vector<8x32xbf16>, vector<32x32xbf16>, vector<8x32xf32> -> vector<8x32xf32>
    %6 = arith.truncf %5 : vector<8x32xf32> to vector<8x32xbf16>
    %7 = vector.extract_strided_slice %6 {offsets = [0, 0], sizes = [8, 8], strides = [1, 1]} : vector<8x32xbf16> to vector<8x8xbf16>
    %c0_5 = arith.constant 0 : index
    %c0_6 = arith.constant 0 : index
    %c0_7 = arith.constant 0 : index
    %c0_8 = arith.constant 0 : index
    %8 = vector.load %arg5[%c0_5, %c0_6, %c0_7, %c0_8] : memref<1x4x8x8xbf16, #tpu.memory_space<vmem>>, vector<1x1x8x8xbf16>
    %9 = vector.shape_cast %8 : vector<1x1x8x8xbf16> to vector<8x8xbf16>
    %10 = vector.shape_cast %7 : vector<8x8xbf16> to vector<1x1x8x8xbf16>
    tpu.vector_store %arg5[%c0_5, %c0_6, %c0_7, %c0_8], %10 {strides = array<i32>} : memref<1x4x8x8xbf16, #tpu.memory_space<vmem>>, vector<1x1x8x8xbf16>,
    %11 = vector.extract_strided_slice %6 {offsets = [0, 8], sizes = [8, 8], strides = [1, 1]} : vector<8x32xbf16> to vector<8x8xbf16>
    %c0_9 = arith.constant 0 : index
    %c1 = arith.constant 1 : index
    %c0_10 = arith.constant 0 : index
    %c0_11 = arith.constant 0 : index
    %12 = vector.load %arg5[%c0_9, %c1, %c0_10, %c0_11] : memref<1x4x8x8xbf16, #tpu.memory_space<vmem>>, vector<1x1x8x8xbf16>
    %13 = vector.shape_cast %12 : vector<1x1x8x8xbf16> to vector<8x8xbf16>
    %14 = vector.shape_cast %11 : vector<8x8xbf16> to vector<1x1x8x8xbf16>
    tpu.vector_store %arg5[%c0_9, %c1, %c0_10, %c0_11], %14 {strides = array<i32>} : memref<1x4x8x8xbf16, #tpu.memory_space<vmem>>, vector<1x1x8x8xbf16>,
    %15 = vector.extract_strided_slice %6 {offsets = [0, 16], sizes = [8, 8], strides = [1, 1]} : vector<8x32xbf16> to vector<8x8xbf16>
    %c0_12 = arith.constant 0 : index
    %c2 = arith.constant 2 : index
    %c0_13 = arith.constant 0 : index
    %c0_14 = arith.constant 0 : index
    %16 = vector.load %arg5[%c0_12, %c2, %c0_13, %c0_14] : memref<1x4x8x8xbf16, #tpu.memory_space<vmem>>, vector<1x1x8x8xbf16>
    %17 = vector.shape_cast %16 : vector<1x1x8x8xbf16> to vector<8x8xbf16>
    %18 = vector.shape_cast %15 : vector<8x8xbf16> to vector<1x1x8x8xbf16>
    tpu.vector_store %arg5[%c0_12, %c2, %c0_13, %c0_14], %18 {strides = array<i32>} : memref<1x4x8x8xbf16, #tpu.memory_space<vmem>>, vector<1x1x8x8xbf16>,
    %19 = vector.extract_strided_slice %6 {offsets = [0, 24], sizes = [8, 8], strides = [1, 1]} : vector<8x32xbf16> to vector<8x8xbf16>
    %c0_15 = arith.constant 0 : index
    %c3 = arith.constant 3 : index
    %c0_16 = arith.constant 0 : index
    %c0_17 = arith.constant 0 : index
    %20 = vector.load %arg5[%c0_15, %c3, %c0_16, %c0_17] : memref<1x4x8x8xbf16, #tpu.memory_space<vmem>>, vector<1x1x8x8xbf16>
    %21 = vector.shape_cast %20 : vector<1x1x8x8xbf16> to vector<8x8xbf16>
    %22 = vector.shape_cast %19 : vector<8x8xbf16> to vector<1x1x8x8xbf16>
    tpu.vector_store %arg5[%c0_15, %c3, %c0_16, %c0_17], %22 {strides = array<i32>} : memref<1x4x8x8xbf16, #tpu.memory_space<vmem>>, vector<1x1x8x8xbf16>,
    return
  }
  func.func @transform_0(%arg0: i32, %arg1: i32, %arg2: i32) -> (i32, i32, i32) {
    %c0_i32 = arith.constant 0 : i32
    %c0_i32_0 = arith.constant 0 : i32
    return %arg0, %arg2, %c0_i32 : i32, i32, i32
  }
  func.func @transform_1(%arg0: i32, %arg1: i32, %arg2: i32) -> (i32, i32, i32) {
    %c0_i32 = arith.constant 0 : i32
    %c0_i32_0 = arith.constant 0 : i32
    %c0_i32_1 = arith.constant 0 : i32
    return %arg1, %c0_i32, %c0_i32_0 : i32, i32, i32
  }
  func.func @transform_2(%arg0: i32, %arg1: i32, %arg2: i32) -> (i32, i32, i32, i32) {
    %c0_i32 = arith.constant 0 : i32
    %c0_i32_0 = arith.constant 0 : i32
    return %arg0, %arg1, %arg2, %c0_i32 : i32, i32, i32, i32
  }
}

module attributes {stable_mosaic.version = 11 : i64} {
  func.func @_out_proj_kernel(%arg0: i32, %arg1: i32, %arg2: i32, %arg3: memref<1x1x8x8xbf16, #tpu.memory_space<vmem>>, %arg4: memref<1x8x32xbf16, #tpu.memory_space<vmem>>, %arg5: memref<1x32xf32, #tpu.memory_space<vmem>>, %arg6: memref<1x8x32xf32, #tpu.memory_space<vmem>>, %arg7: memref<8x32xf32, #tpu.memory_space<vmem>>) attributes {dimension_semantics = [#tpu.dimension_semantics<parallel>, #tpu.dimension_semantics<parallel>, #tpu.dimension_semantics<arbitrary>], iteration_bounds = array<i64: 2, 1, 4>, scalar_prefetch = 0 : i64, scratch_operands = 1 : i64, tpu.core_type = #tpu.core_type<tc>, window_params = [{transform_indices = @transform_0, window_bounds = array<i64: 1, 1, 8, 8>}, {transform_indices = @transform_1, window_bounds = array<i64: 1, 8, 32>}, {pipeline_mode = #tpu.pipeline_mode<synchronous>, transform_indices = @transform_2, window_bounds = array<i64: 1, 32>}, {transform_indices = @transform_3, window_bounds = array<i64: 1, 8, 32>}]} {
    %c0_i32 = arith.constant 0 : i32
    %0 = arith.cmpi eq, %arg2, %c0_i32 : i32
    %1 = arith.extui %0 : i1 to i32
    %c0_i32_0 = arith.constant 0 : i32
    %2 = arith.cmpi ne, %1, %c0_i32_0 : i32
    scf.if %2 {
      %cst_12 = arith.constant 0.000000e+00 : f32
      %14 = vector.broadcast %cst_12 : f32 to vector<8x32xf32>
      %c0_13 = arith.constant 0 : index
      %c0_14 = arith.constant 0 : index
      %15 = vector.load %arg7[%c0_13, %c0_14] : memref<8x32xf32, #tpu.memory_space<vmem>>, vector<8x32xf32>
      tpu.vector_store %arg7[%c0_13, %c0_14], %14 {strides = array<i32>} : memref<8x32xf32, #tpu.memory_space<vmem>>, vector<8x32xf32>,
    } else {
    }
    %c0 = arith.constant 0 : index
    %c0_1 = arith.constant 0 : index
    %3 = vector.load %arg7[%c0, %c0_1] : memref<8x32xf32, #tpu.memory_space<vmem>>, vector<8x32xf32>
    %c0_2 = arith.constant 0 : index
    %c0_3 = arith.constant 0 : index
    %c0_4 = arith.constant 0 : index
    %c0_5 = arith.constant 0 : index
    %4 = vector.load %arg3[%c0_2, %c0_3, %c0_4, %c0_5] : memref<1x1x8x8xbf16, #tpu.memory_space<vmem>>, vector<1x1x8x8xbf16>
    %5 = vector.shape_cast %4 : vector<1x1x8x8xbf16> to vector<8x8xbf16>
    %c0_6 = arith.constant 0 : index
    %c0_7 = arith.constant 0 : index
    %c0_8 = arith.constant 0 : index
    %6 = vector.load %arg4[%c0_6, %c0_7, %c0_8] : memref<1x8x32xbf16, #tpu.memory_space<vmem>>, vector<1x8x32xbf16>
    %7 = vector.shape_cast %6 : vector<1x8x32xbf16> to vector<8x32xbf16>
    %cst = arith.constant dense<0.000000e+00> : vector<8x32xf32>
    %8 = tpu.matmul %5, %7, %cst {dimension_numbers = #tpu.dot_dimension_numbers<[1], [0], [0], [1], [0, 0, 1, 1], [], []>} : vector<8x8xbf16>, vector<8x32xbf16>, vector<8x32xf32> -> vector<8x32xf32>
    %9 = arith.addf %3, %8 : vector<8x32xf32>
    %c0_9 = arith.constant 0 : index
    %c0_10 = arith.constant 0 : index
    %10 = vector.load %arg7[%c0_9, %c0_10] : memref<8x32xf32, #tpu.memory_space<vmem>>, vector<8x32xf32>
    tpu.vector_store %arg7[%c0_9, %c0_10], %9 {strides = array<i32>} : memref<8x32xf32, #tpu.memory_space<vmem>>, vector<8x32xf32>,
    %c3_i32 = arith.constant 3 : i32
    %11 = arith.cmpi eq, %arg2, %c3_i32 : i32
    %12 = arith.extui %11 : i1 to i32
    %c0_i32_11 = arith.constant 0 : i32
    %13 = arith.cmpi ne, %12, %c0_i32_11 : i32
    scf.if %13 {
      %c0_12 = arith.constant 0 : index
      %c0_13 = arith.constant 0 : index
      %14 = vector.load %arg7[%c0_12, %c0_13] : memref<8x32xf32, #tpu.memory_space<vmem>>, vector<8x32xf32>
      %c0_14 = arith.constant 0 : index
      %c0_15 = arith.constant 0 : index
      %15 = vector.load %arg5[%c0_14, %c0_15] : memref<1x32xf32, #tpu.memory_space<vmem>>, vector<1x32xf32>
      %16 = vector.broadcast %15 : vector<1x32xf32> to vector<8x32xf32>
      %17 = arith.addf %14, %16 : vector<8x32xf32>
      %c0_16 = arith.constant 0 : index
      %c0_17 = arith.constant 0 : index
      %c0_18 = arith.constant 0 : index
      %18 = vector.load %arg6[%c0_16, %c0_17, %c0_18] : memref<1x8x32xf32, #tpu.memory_space<vmem>>, vector<1x8x32xf32>
      %19 = vector.shape_cast %18 : vector<1x8x32xf32> to vector<8x32xf32>
      %20 = vector.shape_cast %17 : vector<8x32xf32> to vector<1x8x32xf32>
      tpu.vector_store %arg6[%c0_16, %c0_17, %c0_18], %20 {strides = array<i32>} : memref<1x8x32xf32, #tpu.memory_space<vmem>>, vector<1x8x32xf32>,
    } else {
    }
    return
  }
  func.func @transform_0(%arg0: i32, %arg1: i32, %arg2: i32) -> (i32, i32, i32, i32) {
    %c0_i32 = arith.constant 0 : i32
    %c0_i32_0 = arith.constant 0 : i32
    return %arg0, %arg2, %arg1, %c0_i32 : i32, i32, i32, i32
  }
  func.func @transform_1(%arg0: i32, %arg1: i32, %arg2: i32) -> (i32, i32, i32) {
    %c0_i32 = arith.constant 0 : i32
    %c0_i32_0 = arith.constant 0 : i32
    %c0_i32_1 = arith.constant 0 : i32
    return %arg2, %c0_i32, %c0_i32_0 : i32, i32, i32
  }
  func.func @transform_2(%arg0: i32, %arg1: i32, %arg2: i32) -> (i32, i32) {
    %c0_i32 = arith.constant 0 : i32
    %c0_i32_0 = arith.constant 0 : i32
    %c0_i32_1 = arith.constant 0 : i32
    return %c0_i32, %c0_i32_0 : i32, i32
  }
  func.func @transform_3(%arg0: i32, %arg1: i32, %arg2: i32) -> (i32, i32, i32) {
    %c0_i32 = arith.constant 0 : i32
    %c0_i32_0 = arith.constant 0 : i32
    return %arg0, %arg1, %c0_i32 : i32, i32, i32
  }
}

module attributes {stable_mosaic.version = 11 : i64} {
  func.func @_flash_attn_kernel(%arg0: i32, %arg1: i32, %arg2: i32, %arg3: memref<1xi32, #tpu.memory_space<smem>>, %arg4: memref<1xi32, #tpu.memory_space<smem>>, %arg5: memref<1x1x8x8xbf16, #tpu.memory_space<vmem>>, %arg6: memref<1x1x8x8xbf16, #tpu.memory_space<vmem>>, %arg7: memref<1x1x8x8xbf16, #tpu.memory_space<vmem>>, %arg8: memref<1x1x8x8xbf16, #tpu.memory_space<vmem>>, %arg9: memref<8x1xf32, #tpu.memory_space<vmem>>, %arg10: memref<8x1xf32, #tpu.memory_space<vmem>>, %arg11: memref<8x8xf32, #tpu.memory_space<vmem>>) attributes {dimension_semantics = [#tpu.dimension_semantics<parallel>, #tpu.dimension_semantics<parallel>, #tpu.dimension_semantics<arbitrary>], iteration_bounds = array<i64: 2, 4, 1>, scalar_prefetch = 2 : i64, scratch_operands = 3 : i64, tpu.core_type = #tpu.core_type<tc>, window_params = [{transform_indices = @transform_0, window_bounds = array<i64: 1, 1, 8, 8>}, {transform_indices = @transform_1, window_bounds = array<i64: 1, 1, 8, 8>}, {transform_indices = @transform_2, window_bounds = array<i64: 1, 1, 8, 8>}, {transform_indices = @transform_3, window_bounds = array<i64: 1, 1, 8, 8>}]} {
    %0 = arith.index_cast %arg2 : i32 to index
    %1 = memref.load %arg3[%0] : memref<1xi32, #tpu.memory_space<smem>>
    %2 = arith.index_cast %arg2 : i32 to index
    %3 = memref.load %arg4[%2] : memref<1xi32, #tpu.memory_space<smem>>
    %c0_i32 = arith.constant 0 : i32
    %4 = arith.cmpi eq, %3, %c0_i32 : i32
    %5 = arith.extui %4 : i1 to i32
    %c0_i32_0 = arith.constant 0 : i32
    %6 = arith.cmpi ne, %5, %c0_i32_0 : i32
    scf.if %6 {
      %cst = arith.constant 0xFF800000 : f32
      %13 = vector.broadcast %cst : f32 to vector<8x1xf32>
      %c0 = arith.constant 0 : index
      %c0_3 = arith.constant 0 : index
      %14 = vector.load %arg9[%c0, %c0_3] : memref<8x1xf32, #tpu.memory_space<vmem>>, vector<8x1xf32>
      tpu.vector_store %arg9[%c0, %c0_3], %13 {strides = array<i32>} : memref<8x1xf32, #tpu.memory_space<vmem>>, vector<8x1xf32>,
      %cst_4 = arith.constant 0.000000e+00 : f32
      %15 = vector.broadcast %cst_4 : f32 to vector<8x1xf32>
      %c0_5 = arith.constant 0 : index
      %c0_6 = arith.constant 0 : index
      %16 = vector.load %arg10[%c0_5, %c0_6] : memref<8x1xf32, #tpu.memory_space<vmem>>, vector<8x1xf32>
      tpu.vector_store %arg10[%c0_5, %c0_6], %15 {strides = array<i32>} : memref<8x1xf32, #tpu.memory_space<vmem>>, vector<8x1xf32>,
      %cst_7 = arith.constant 0.000000e+00 : f32
      %17 = vector.broadcast %cst_7 : f32 to vector<8x8xf32>
      %c0_8 = arith.constant 0 : index
      %c0_9 = arith.constant 0 : index
      %18 = vector.load %arg11[%c0_8, %c0_9] : memref<8x8xf32, #tpu.memory_space<vmem>>, vector<8x8xf32>
      tpu.vector_store %arg11[%c0_8, %c0_9], %17 {strides = array<i32>} : memref<8x8xf32, #tpu.memory_space<vmem>>, vector<8x8xf32>,
    } else {
    }
    %7 = arith.cmpi slt, %3, %1 : i32
    %8 = arith.extui %7 : i1 to i32
    %c0_i32_1 = arith.constant 0 : i32
    %9 = arith.cmpi ne, %8, %c0_i32_1 : i32
    scf.if %9 {
      %c0 = arith.constant 0 : index
      %c0_3 = arith.constant 0 : index
      %c0_4 = arith.constant 0 : index
      %c0_5 = arith.constant 0 : index
      %13 = vector.load %arg5[%c0, %c0_3, %c0_4, %c0_5] : memref<1x1x8x8xbf16, #tpu.memory_space<vmem>>, vector<1x1x8x8xbf16>
      %14 = vector.shape_cast %13 : vector<1x1x8x8xbf16> to vector<8x8xbf16>
      %c0_6 = arith.constant 0 : index
      %c0_7 = arith.constant 0 : index
      %c0_8 = arith.constant 0 : index
      %c0_9 = arith.constant 0 : index
      %15 = vector.load %arg6[%c0_6, %c0_7, %c0_8, %c0_9] : memref<1x1x8x8xbf16, #tpu.memory_space<vmem>>, vector<1x1x8x8xbf16>
      %16 = vector.shape_cast %15 : vector<1x1x8x8xbf16> to vector<8x8xbf16>
      %c0_10 = arith.constant 0 : index
      %c0_11 = arith.constant 0 : index
      %c0_12 = arith.constant 0 : index
      %c0_13 = arith.constant 0 : index
      %17 = vector.load %arg7[%c0_10, %c0_11, %c0_12, %c0_13] : memref<1x1x8x8xbf16, #tpu.memory_space<vmem>>, vector<1x1x8x8xbf16>
      %18 = vector.shape_cast %17 : vector<1x1x8x8xbf16> to vector<8x8xbf16>
      %cst = arith.constant dense<0.000000e+00> : vector<8x8xf32>
      %19 = tpu.matmul %14, %16, %cst {dimension_numbers = #tpu.dot_dimension_numbers<[1], [1], [0], [0], [0, 0, 1, 0], [], []>} : vector<8x8xbf16>, vector<8x8xbf16>, vector<8x8xf32> -> vector<8x8xf32>
      %c0_14 = arith.constant 0 : index
      %c0_15 = arith.constant 0 : index
      %20 = vector.load %arg9[%c0_14, %c0_15] : memref<8x1xf32, #tpu.memory_space<vmem>>, vector<8x1xf32>
      %cst_16 = arith.constant dense<0xFF800000> : vector<8xf32>
      %21 = vector.multi_reduction <maximumf>, %19, %cst_16 [1] : vector<8x8xf32> to vector<8xf32>
      %22 = vector.shape_cast %21 : vector<8xf32> to vector<8x1xf32>
      %23 = arith.maximumf %20, %22 : vector<8x1xf32>
      %24 = arith.subf %20, %23 : vector<8x1xf32>
      %25 = math.exp %24 : vector<8x1xf32>
      %26 = vector.broadcast %23 : vector<8x1xf32> to vector<8x8xf32>
      %27 = arith.subf %19, %26 : vector<8x8xf32>
      %28 = math.exp %27 : vector<8x8xf32>
      %c0_17 = arith.constant 0 : index
      %c0_18 = arith.constant 0 : index
      %29 = vector.load %arg10[%c0_17, %c0_18] : memref<8x1xf32, #tpu.memory_space<vmem>>, vector<8x1xf32>
      %30 = arith.mulf %25, %29 : vector<8x1xf32>
      %cst_19 = arith.constant dense<0.000000e+00> : vector<8xf32>
      %31 = vector.multi_reduction <add>, %28, %cst_19 [1] : vector<8x8xf32> to vector<8xf32>
      %32 = vector.shape_cast %31 : vector<8xf32> to vector<8x1xf32>
      %33 = arith.addf %30, %32 : vector<8x1xf32>
      %c0_20 = arith.constant 0 : index
      %c0_21 = arith.constant 0 : index
      %34 = vector.load %arg10[%c0_20, %c0_21] : memref<8x1xf32, #tpu.memory_space<vmem>>, vector<8x1xf32>
      tpu.vector_store %arg10[%c0_20, %c0_21], %33 {strides = array<i32>} : memref<8x1xf32, #tpu.memory_space<vmem>>, vector<8x1xf32>,
      %c0_22 = arith.constant 0 : index
      %c0_23 = arith.constant 0 : index
      %35 = vector.load %arg11[%c0_22, %c0_23] : memref<8x8xf32, #tpu.memory_space<vmem>>, vector<8x8xf32>
      %36 = vector.broadcast %25 : vector<8x1xf32> to vector<8x8xf32>
      %37 = arith.mulf %36, %35 : vector<8x8xf32>
      %38 = arith.truncf %28 : vector<8x8xf32> to vector<8x8xbf16>
      %cst_24 = arith.constant dense<0.000000e+00> : vector<8x8xf32>
      %39 = tpu.matmul %38, %18, %cst_24 {dimension_numbers = #tpu.dot_dimension_numbers<[1], [0], [0], [1], [0, 0, 1, 1], [], []>} : vector<8x8xbf16>, vector<8x8xbf16>, vector<8x8xf32> -> vector<8x8xf32>
      %40 = arith.addf %37, %39 : vector<8x8xf32>
      %c0_25 = arith.constant 0 : index
      %c0_26 = arith.constant 0 : index
      %41 = vector.load %arg11[%c0_25, %c0_26] : memref<8x8xf32, #tpu.memory_space<vmem>>, vector<8x8xf32>
      tpu.vector_store %arg11[%c0_25, %c0_26], %40 {strides = array<i32>} : memref<8x8xf32, #tpu.memory_space<vmem>>, vector<8x8xf32>,
      %c0_27 = arith.constant 0 : index
      %c0_28 = arith.constant 0 : index
      %42 = vector.load %arg9[%c0_27, %c0_28] : memref<8x1xf32, #tpu.memory_space<vmem>>, vector<8x1xf32>
      tpu.vector_store %arg9[%c0_27, %c0_28], %23 {strides = array<i32>} : memref<8x1xf32, #tpu.memory_space<vmem>>, vector<8x1xf32>,
    } else {
    }
    %10 = arith.cmpi eq, %3, %1 : i32
    %11 = arith.extui %10 : i1 to i32
    %c0_i32_2 = arith.constant 0 : i32
    %12 = arith.cmpi ne, %11, %c0_i32_2 : i32
    scf.if %12 {
      %c0 = arith.constant 0 : index
      %c0_3 = arith.constant 0 : index
      %c0_4 = arith.constant 0 : index
      %c0_5 = arith.constant 0 : index
      %13 = vector.load %arg5[%c0, %c0_3, %c0_4, %c0_5] : memref<1x1x8x8xbf16, #tpu.memory_space<vmem>>, vector<1x1x8x8xbf16>
      %14 = vector.shape_cast %13 : vector<1x1x8x8xbf16> to vector<8x8xbf16>
      %c0_6 = arith.constant 0 : index
      %c0_7 = arith.constant 0 : index
      %c0_8 = arith.constant 0 : index
      %c0_9 = arith.constant 0 : index
      %15 = vector.load %arg6[%c0_6, %c0_7, %c0_8, %c0_9] : memref<1x1x8x8xbf16, #tpu.memory_space<vmem>>, vector<1x1x8x8xbf16>
      %16 = vector.shape_cast %15 : vector<1x1x8x8xbf16> to vector<8x8xbf16>
      %c0_10 = arith.constant 0 : index
      %c0_11 = arith.constant 0 : index
      %c0_12 = arith.constant 0 : index
      %c0_13 = arith.constant 0 : index
      %17 = vector.load %arg7[%c0_10, %c0_11, %c0_12, %c0_13] : memref<1x1x8x8xbf16, #tpu.memory_space<vmem>>, vector<1x1x8x8xbf16>
      %18 = vector.shape_cast %17 : vector<1x1x8x8xbf16> to vector<8x8xbf16>
      %cst = arith.constant dense<0.000000e+00> : vector<8x8xf32>
      %19 = tpu.matmul %14, %16, %cst {dimension_numbers = #tpu.dot_dimension_numbers<[1], [1], [0], [0], [0, 0, 1, 0], [], []>} : vector<8x8xbf16>, vector<8x8xbf16>, vector<8x8xf32> -> vector<8x8xf32>
      %20 = tpu.iota {dimensions = array<i32: 0>} : vector<8x8xi32>
      %21 = tpu.iota {dimensions = array<i32: 1>} : vector<8x8xi32>
      %22 = arith.cmpi sge, %20, %21 : vector<8x8xi32>
      %cst_14 = arith.constant -3.40282347E+38 : f32
      %23 = vector.broadcast %cst_14 : f32 to vector<8x8xf32>
      %24 = arith.select %22, %19, %23 : vector<8x8xi1>, vector<8x8xf32>
      %c0_15 = arith.constant 0 : index
      %c0_16 = arith.constant 0 : index
      %25 = vector.load %arg9[%c0_15, %c0_16] : memref<8x1xf32, #tpu.memory_space<vmem>>, vector<8x1xf32>
      %cst_17 = arith.constant dense<0xFF800000> : vector<8xf32>
      %26 = vector.multi_reduction <maximumf>, %24, %cst_17 [1] : vector<8x8xf32> to vector<8xf32>
      %27 = vector.shape_cast %26 : vector<8xf32> to vector<8x1xf32>
      %28 = arith.maximumf %25, %27 : vector<8x1xf32>
      %29 = arith.subf %25, %28 : vector<8x1xf32>
      %30 = math.exp %29 : vector<8x1xf32>
      %31 = vector.broadcast %28 : vector<8x1xf32> to vector<8x8xf32>
      %32 = arith.subf %24, %31 : vector<8x8xf32>
      %33 = math.exp %32 : vector<8x8xf32>
      %c0_18 = arith.constant 0 : index
      %c0_19 = arith.constant 0 : index
      %34 = vector.load %arg10[%c0_18, %c0_19] : memref<8x1xf32, #tpu.memory_space<vmem>>, vector<8x1xf32>
      %35 = arith.mulf %30, %34 : vector<8x1xf32>
      %cst_20 = arith.constant dense<0.000000e+00> : vector<8xf32>
      %36 = vector.multi_reduction <add>, %33, %cst_20 [1] : vector<8x8xf32> to vector<8xf32>
      %37 = vector.shape_cast %36 : vector<8xf32> to vector<8x1xf32>
      %38 = arith.addf %35, %37 : vector<8x1xf32>
      %c0_21 = arith.constant 0 : index
      %c0_22 = arith.constant 0 : index
      %39 = vector.load %arg10[%c0_21, %c0_22] : memref<8x1xf32, #tpu.memory_space<vmem>>, vector<8x1xf32>
      tpu.vector_store %arg10[%c0_21, %c0_22], %38 {strides = array<i32>} : memref<8x1xf32, #tpu.memory_space<vmem>>, vector<8x1xf32>,
      %c0_23 = arith.constant 0 : index
      %c0_24 = arith.constant 0 : index
      %40 = vector.load %arg11[%c0_23, %c0_24] : memref<8x8xf32, #tpu.memory_space<vmem>>, vector<8x8xf32>
      %41 = vector.broadcast %30 : vector<8x1xf32> to vector<8x8xf32>
      %42 = arith.mulf %41, %40 : vector<8x8xf32>
      %43 = arith.truncf %33 : vector<8x8xf32> to vector<8x8xbf16>
      %cst_25 = arith.constant dense<0.000000e+00> : vector<8x8xf32>
      %44 = tpu.matmul %43, %18, %cst_25 {dimension_numbers = #tpu.dot_dimension_numbers<[1], [0], [0], [1], [0, 0, 1, 1], [], []>} : vector<8x8xbf16>, vector<8x8xbf16>, vector<8x8xf32> -> vector<8x8xf32>
      %45 = arith.addf %42, %44 : vector<8x8xf32>
      %c0_26 = arith.constant 0 : index
      %c0_27 = arith.constant 0 : index
      %46 = vector.load %arg11[%c0_26, %c0_27] : memref<8x8xf32, #tpu.memory_space<vmem>>, vector<8x8xf32>
      tpu.vector_store %arg11[%c0_26, %c0_27], %45 {strides = array<i32>} : memref<8x8xf32, #tpu.memory_space<vmem>>, vector<8x8xf32>,
      %c0_28 = arith.constant 0 : index
      %c0_29 = arith.constant 0 : index
      %47 = vector.load %arg9[%c0_28, %c0_29] : memref<8x1xf32, #tpu.memory_space<vmem>>, vector<8x1xf32>
      tpu.vector_store %arg9[%c0_28, %c0_29], %28 {strides = array<i32>} : memref<8x1xf32, #tpu.memory_space<vmem>>, vector<8x1xf32>,
      %c0_30 = arith.constant 0 : index
      %c0_31 = arith.constant 0 : index
      %48 = vector.load %arg10[%c0_30, %c0_31] : memref<8x1xf32, #tpu.memory_space<vmem>>, vector<8x1xf32>
      %49 = tpu.reciprocal %48 {approx = true} : vector<8x1xf32> -> vector<8x1xf32>
      %c0_32 = arith.constant 0 : index
      %c0_33 = arith.constant 0 : index
      %50 = vector.load %arg11[%c0_32, %c0_33] : memref<8x8xf32, #tpu.memory_space<vmem>>, vector<8x8xf32>
      %51 = vector.broadcast %49 : vector<8x1xf32> to vector<8x8xf32>
      %52 = arith.mulf %50, %51 : vector<8x8xf32>
      %53 = arith.truncf %52 : vector<8x8xf32> to vector<8x8xbf16>
      %c0_34 = arith.constant 0 : index
      %c0_35 = arith.constant 0 : index
      %c0_36 = arith.constant 0 : index
      %c0_37 = arith.constant 0 : index
      %54 = vector.load %arg8[%c0_34, %c0_35, %c0_36, %c0_37] : memref<1x1x8x8xbf16, #tpu.memory_space<vmem>>, vector<1x1x8x8xbf16>
      %55 = vector.shape_cast %54 : vector<1x1x8x8xbf16> to vector<8x8xbf16>
      %56 = vector.shape_cast %53 : vector<8x8xbf16> to vector<1x1x8x8xbf16>
      tpu.vector_store %arg8[%c0_34, %c0_35, %c0_36, %c0_37], %56 {strides = array<i32>} : memref<1x1x8x8xbf16, #tpu.memory_space<vmem>>, vector<1x1x8x8xbf16>,
    } else {
    }
    return
  }
  func.func @transform_0(%arg0: i32, %arg1: i32, %arg2: i32, %arg3: memref<1xi32, #tpu.memory_space<smem>>, %arg4: memref<1xi32, #tpu.memory_space<smem>>) -> (i32, i32, i32, i32) {
    %0 = arith.index_cast %arg2 : i32 to index
    %1 = memref.load %arg3[%0] : memref<1xi32, #tpu.memory_space<smem>>
    %c0_i32 = arith.constant 0 : i32
    %c0_i32_0 = arith.constant 0 : i32
    return %arg0, %arg1, %1, %c0_i32 : i32, i32, i32, i32
  }
  func.func @transform_1(%arg0: i32, %arg1: i32, %arg2: i32, %arg3: memref<1xi32, #tpu.memory_space<smem>>, %arg4: memref<1xi32, #tpu.memory_space<smem>>) -> (i32, i32, i32, i32) {
    %c4_i32 = arith.constant 4 : i32
    %0 = arith.addi %arg1, %c4_i32 : i32
    %1 = arith.index_cast %arg2 : i32 to index
    %2 = memref.load %arg4[%1] : memref<1xi32, #tpu.memory_space<smem>>
    %c0_i32 = arith.constant 0 : i32
    %c0_i32_0 = arith.constant 0 : i32
    return %arg0, %0, %2, %c0_i32 : i32, i32, i32, i32
  }
  func.func @transform_2(%arg0: i32, %arg1: i32, %arg2: i32, %arg3: memref<1xi32, #tpu.memory_space<smem>>, %arg4: memref<1xi32, #tpu.memory_space<smem>>) -> (i32, i32, i32, i32) {
    %c8_i32 = arith.constant 8 : i32
    %0 = arith.addi %arg1, %c8_i32 : i32
    %1 = arith.index_cast %arg2 : i32 to index
    %2 = memref.load %arg4[%1] : memref<1xi32, #tpu.memory_space<smem>>
    %c0_i32 = arith.constant 0 : i32
    %c0_i32_0 = arith.constant 0 : i32
    return %arg0, %0, %2, %c0_i32 : i32, i32, i32, i32
  }
  func.func @transform_3(%arg0: i32, %arg1: i32, %arg2: i32, %arg3: memref<1xi32, #tpu.memory_space<smem>>, %arg4: memref<1xi32, #tpu.memory_space<smem>>) -> (i32, i32, i32, i32) {
    %0 = arith.index_cast %arg2 : i32 to index
    %1 = memref.load %arg3[%0] : memref<1xi32, #tpu.memory_space<smem>>
    %c0_i32 = arith.constant 0 : i32
    %c0_i32_0 = arith.constant 0 : i32
    return %arg0, %arg1, %1, %c0_i32 : i32, i32, i32, i32
  }
}

</mosaic_0001>

<llo_original>
// kernel: gpt_neo_self_attention.3
$region0: #{gpt_neo_self_attention.3}
  #allocation0 [shape = 'u32[]', space=smem, size = 0x4, offset = 0x4, fixed_abs, tag = 'smem constant byte address 0x4 - core index']
  #allocation1 [shape = 'u32[144,128]{1,0:T(1,128)}', space=vmem, size = 0x12000, scoped, tag = 'internal scratch']
  %s0 = inlined_call_operand.hbm [shape: f32[2,8,32], index: 0, kind: input, shape index: {}]
  %s1 = inlined_call_operand.hbm [shape: bf16[3,32,32], index: 1, kind: input, shape index: {}]
  %s2 = inlined_call_operand.vmem [shape: bf16[2,12,8,8], index: 2, kind: output, shape index: {}]
  %s3 = sld [smem:[#allocation0]]
  $region49: #{gpt_neo_self_attention.3} parent=0
    _
  %s5 = ssub.s32 1, %s3
  %s6 = scalar_select 0, %s5, %s3
  $region1: #{gpt_neo_self_attention.3} parent=0
    #allocation2 [shape = 'u8[8192]{0}', space=vmem, size = 0x2000, scoped, tag = 'input window, operand 0']
    #allocation3 [shape = 's32[2]{0}', space=sflag, size = 0x8, scoped, tag = 'scoped memory for gpt_neo_self_attention.3']
    #allocation4 [shape = 'u8[16384]{0}', space=vmem, size = 0x4000, scoped, tag = 'input window, operand 1']
    #allocation5 [shape = 's32[2]{0}', space=sflag, size = 0x8, scoped, tag = 'scoped memory for gpt_neo_self_attention.3']
    %7 = vsyncpa [#allocation3], 0
    %s8 = scalar_lea.sflag [#allocation3], 1
    %9 = vsyncpa %s8, 0
    %10 = vsyncpa [#allocation5], 0
    %s11 = scalar_lea.sflag [#allocation5], 1
    %12 = vsyncpa %s11, 0
    loop: start=0, step=1, limit=8
    $region2: #{gpt_neo_self_attention.3} parent=1 // loop_pre_header
      _
    $region3: #{gpt_neo_self_attention.3} parent=1 // loop_header
      %s14 = sphi 0, %s18
      %p15 = scmp.ge.s32.totalorder %s14, 8
      %s21 = sphi 0, %s40
      %s22 = sphi 0, %s36
      %s23 = sphi 0, %s32
      %s24 = sphi 0, %s21
      %s25 = sphi 0, %s22
      %s26 = sphi 0, %s23
      %s27 = sphi 0, %s24
      %s28 = sphi 0, %s25
      %s29 = sphi 0, %s26
      %s45 = sphi 0, %s47
      %s48 = sphi 0, %s45
      %s49 = sphi 0, %s48
      %s65 = sphi 0, %s49
      %s71 = sphi 0, %s73
      %s74 = sphi 0, %s71
      %s75 = sphi 0, %s74
      %s91 = sphi 0, %s75
      %s101 = sphi 0, %s103
      %s104 = sphi 0, %s101
      %s105 = sphi 0, %s104
      %s121 = sphi 0, %s105
    $region4: #{gpt_neo_self_attention.3} parent=1 // loop_header_branch
      %17 = sbr.rel (%p15) target = $region8
    $region5: #{gpt_neo_self_attention.3} parent=1 // loop_body
      %s19 = ssub.s32 %s14, 1
      %s20 = ssub.s32 %s14, 2
      %s30 = sadd.s32 1, %s23
      %p31 = scmp.ge.s32.totalorder %s30, 1
      %s32 = scalar_select %p31, 0, %s30
      %s33 = sadd.s32 1, %s22
      %s34 = scalar_select %p31, %s33, %s22
      %p35 = scmp.ge.s32.totalorder %s34, 3
      %s36 = scalar_select %p35, 0, %s34
      %s37 = sadd.s32 1, %s21
      %s38 = scalar_select %p35, %s37, %s21
      %p39 = scmp.ge.s32.totalorder %s38, 2
      %s40 = scalar_select %p39, 0, %s38
      %s41 = ssub.s32 %s21, %s40
      %s42 = ssub.s32 %s23, %s32
      %s43 = sor.u32 %s41, %s42
      %p44 = scmp.eq.s32.totalorder %s43, 0
      %s46 = sadd.s32 %s45, 1
      %s47 = scalar_select %p44, %s45, %s46
      %p50 = pneg %p44
      %p51 = scmp.eq.s32.totalorder %s14, 5
      %p52 = por %p50, %p51
      %p53 = scmp.ne.s32.totalorder %s45, %s48
      %p54 = scmp.eq.s32.totalorder %s14, 0
      %p55 = por %p53, %p54
      %p56 = scmp.ne.s32.totalorder %s45, %s48
      %p57 = scmp.eq.s32.totalorder %s19, 5
      %p58 = por %p56, %p57
      %p59 = scmp.ne.s32.totalorder %s48, %s49
      %p60 = scmp.eq.s32.totalorder %s19, 0
      %p61 = por %p59, %p60
      %p62 = scmp.ne.s32.totalorder %s48, %s49
      %p63 = scmp.eq.s32.totalorder %s20, 5
      %p64 = por %p62, %p63
      %p66 = scmp.ne.s32.totalorder %s49, %s65
      %p67 = scmp.eq.s32.totalorder %s20, 0
      %p68 = por %p66, %p67
      %s69 = ssub.s32 %s22, %s36
      %p70 = scmp.eq.s32.totalorder %s69, 0
      %s72 = sadd.s32 %s71, 1
      %s73 = scalar_select %p70, %s71, %s72
      %p76 = pneg %p70
      %p77 = scmp.eq.s32.totalorder %s14, 5
      %p78 = por %p76, %p77
      %p79 = scmp.ne.s32.totalorder %s71, %s74
      %p80 = scmp.eq.s32.totalorder %s14, 0
      %p81 = por %p79, %p80
      %p82 = scmp.ne.s32.totalorder %s71, %s74
      %p83 = scmp.eq.s32.totalorder %s19, 5
      %p84 = por %p82, %p83
      %p85 = scmp.ne.s32.totalorder %s74, %s75
      %p86 = scmp.eq.s32.totalorder %s19, 0
      %p87 = por %p85, %p86
      %p88 = scmp.ne.s32.totalorder %s74, %s75
      %p89 = scmp.eq.s32.totalorder %s20, 5
      %p90 = por %p88, %p89
      %p92 = scmp.ne.s32.totalorder %s75, %s91
      %p93 = scmp.eq.s32.totalorder %s20, 0
      %p94 = por %p92, %p93
      %s95 = ssub.s32 %s21, %s40
      %s96 = ssub.s32 %s22, %s36
      %s97 = sor.u32 %s95, %s96
      %s98 = ssub.s32 %s23, %s32
      %s99 = sor.u32 %s97, %s98
      %p100 = scmp.eq.s32.totalorder %s99, 0
      %s102 = sadd.s32 %s101, 1
      %s103 = scalar_select %p100, %s101, %s102
      %p106 = pneg %p100
      %p107 = scmp.eq.s32.totalorder %s14, 5
      %p108 = por %p106, %p107
      %p109 = scmp.ne.s32.totalorder %s101, %s104
      %p110 = scmp.eq.s32.totalorder %s14, 0
      %p111 = por %p109, %p110
      %p112 = scmp.ne.s32.totalorder %s101, %s104
      %p113 = scmp.eq.s32.totalorder %s19, 5
      %p114 = por %p112, %p113
      %p115 = scmp.ne.s32.totalorder %s104, %s105
      %p116 = scmp.eq.s32.totalorder %s19, 0
      %p117 = por %p115, %p116
      %p118 = scmp.ne.s32.totalorder %s104, %s105
      %p119 = scmp.eq.s32.totalorder %s20, 5
      %p120 = por %p118, %p119
      %p122 = scmp.ne.s32.totalorder %s105, %s121
      %p123 = scmp.eq.s32.totalorder %s20, 0
      %p124 = por %p122, %p123
      %p125 = scmp.le.s32.totalorder 1, %s14
      %p126 = scmp.lt.s32.totalorder %s14, 7
      %p127 = pnand %p125, %p126
      %p128 = pneg %p127
      // Predicated region
      $region9: #{gpt_neo_self_attention.3} parent=5 // pred_check
        _
      $region10: #{gpt_neo_self_attention.3} parent=5 // pred_check_branch
        %130 = sbr.rel (%p127) target = $region12
      $region11: #{gpt_neo_self_attention.3} parent=5 // pred_region
        %s131 = ssub.s32 %s14, 1
      $region12: #{gpt_neo_self_attention.3} parent=5 // pred_fallthru
        _
      %p132 = scmp.lt.s32.totalorder %s14, 6
      // Predicated region
      $region13: #{gpt_neo_self_attention.3} parent=5 // pred_check
        %p133 = pneg %p132
      $region14: #{gpt_neo_self_attention.3} parent=5 // pred_check_branch
        %135 = sbr.rel (%p133) target = $region16
      $region15: #{gpt_neo_self_attention.3} parent=5 // pred_region
        // Predicated region
        $region17: #{gpt_neo_self_attention.3} parent=15 // pred_check
          %p136 = pneg %p55
        $region18: #{gpt_neo_self_attention.3} parent=15 // pred_check_branch
          %138 = sbr.rel (%p136) target = $region20
        $region19: #{gpt_neo_self_attention.3} parent=15 // pred_region
          %s139 = sand.u32 %s45, 1
          %s140 = scalar_lea.sflag [#allocation3], %s139
          %s141 = sand.u32 %s45, 1
          %s142 = smul.addr %s141, 8
          %s143 = scalar_lea.vmem [#allocation2], %s142
          %s145 = ssub.s32 128, 128
          %146 = vsyncadd %s140, %s145
          %s147 = sadd.s32 %s23, %s21
          %s148 = smul.addr %s147, 128
          %s149 = scalar_lea.hbm %s0, %s148
          %s151 = sshll.u32 %s143, 4
          %s152 = int_to_ptr.vmem [resolvable:$true] %s151
          %154 = dma.hbm_to_vmem [thread:$0]  %s149, 128, %s152, %s140
        $region20: #{gpt_neo_self_attention.3} parent=15 // pred_fallthru
          _
        // Predicated region
        $region21: #{gpt_neo_self_attention.3} parent=15 // pred_check
          %p155 = pneg %p81
        $region22: #{gpt_neo_self_attention.3} parent=15 // pred_check_branch
          %157 = sbr.rel (%p155) target = $region24
        $region23: #{gpt_neo_self_attention.3} parent=15 // pred_region
          %s158 = sand.u32 %s71, 1
          %s159 = scalar_lea.sflag [#allocation5], %s158
          %s160 = sand.u32 %s71, 1
          %s161 = smul.addr %s160, 16
          %s162 = scalar_lea.vmem [#allocation4], %s161
          %s164 = ssub.s32 256, 256
          %165 = vsyncadd %s159, %s164
          %s166 = smul.addr %s22, 4
          %s167 = smul.addr %s166, 64
          %s168 = scalar_lea.hbm %s1, %s167
          %s169 = sshll.u32 %s162, 4
          %s170 = int_to_ptr.vmem [resolvable:$true] %s169
          %175 = dma.hbm_to_vmem [thread:$0]  %s168, 256, %s170, %s159, 64, 64, 4
        $region24: #{gpt_neo_self_attention.3} parent=15 // pred_fallthru
          _
      $region16: #{gpt_neo_self_attention.3} parent=5 // pred_fallthru
        _
      %p176 = scmp.le.s32.totalorder 1, %s14
      %p177 = scmp.lt.s32.totalorder %s14, 7
      %p178 = pnand %p176, %p177
      %p179 = pneg %p178
      // Predicated region
      $region25: #{gpt_neo_self_attention.3} parent=5 // pred_check
        _
      $region26: #{gpt_neo_self_attention.3} parent=5 // pred_check_branch
        %181 = sbr.rel (%p178) target = $region28
      $region27: #{gpt_neo_self_attention.3} parent=5 // pred_region
        %s182 = ssub.s32 %s14, 1
        %s183 = sand.u32 %s48, 1
        %s184 = scalar_lea.sflag [#allocation3], %s183
        %s185 = sand.u32 %s48, 1
        %s186 = smul.addr %s185, 8
        %s187 = scalar_lea.vmem [#allocation2], %s186
        // Predicated region
        $region29: #{gpt_neo_self_attention.3} parent=27 // pred_check
          %p188 = pneg %p61
        $region30: #{gpt_neo_self_attention.3} parent=27 // pred_check_branch
          %190 = sbr.rel (%p188) target = $region32
        $region31: #{gpt_neo_self_attention.3} parent=27 // pred_region
          %191 = dma.done %s184, 128
        $region32: #{gpt_neo_self_attention.3} parent=27 // pred_fallthru
          _
        %s192 = sand.u32 %s74, 1
        %s193 = scalar_lea.sflag [#allocation5], %s192
        %s194 = sand.u32 %s74, 1
        %s195 = smul.addr %s194, 16
        %s196 = scalar_lea.vmem [#allocation4], %s195
        // Predicated region
        $region33: #{gpt_neo_self_attention.3} parent=27 // pred_check
          %p197 = pneg %p87
        $region34: #{gpt_neo_self_attention.3} parent=27 // pred_check_branch
          %199 = sbr.rel (%p197) target = $region36
        $region35: #{gpt_neo_self_attention.3} parent=27 // pred_region
          %200 = dma.done %s193, 256
        $region36: #{gpt_neo_self_attention.3} parent=27 // pred_fallthru
          _
        %s201 = sand.u32 %s48, 1
        %s202 = scalar_lea.sflag [#allocation3], %s201
        %s203 = sand.u32 %s48, 1
        %s204 = smul.addr %s203, 8
        %s205 = scalar_lea.vmem [#allocation2], %s204
        %p206 = pneg %p61
        %p207 = pneg %p58
        %s208 = sand.u32 %s74, 1
        %s209 = scalar_lea.sflag [#allocation5], %s208
        %s210 = sand.u32 %s74, 1
        %s211 = smul.addr %s210, 16
        %s212 = scalar_lea.vmem [#allocation4], %s211
        %p213 = pneg %p87
        %p214 = pneg %p84
        %p215 = pneg %p117
        %p216 = pneg %p114
        %s217 = smul.u32 4, %s25
        %p218 = scmp.lt.s32.totalorder %s24, 1
        %s219 = scalar_select %p218, %s24, 1
        %p220 = scmp.lt.s32.totalorder %s217, 11
        %s221 = scalar_select %p220, %s217, 11
        %p222 = scmp.lt.s32.totalorder %s26, 0
        %s223 = scalar_select %p222, %s26, 0
        %s224 = sadd.s32 %s223, %s221
        %s225 = smul.addr %s219, 12
        %s226 = sadd.s32 %s224, %s225
        %s227 = smul.addr %s226, 4
        %s228 = scalar_lea.vmem %s2, %s227
        %s229 = smul.u32 4, %s25
        %p230 = scmp.lt.s32.totalorder %s24, 1
        %s231 = scalar_select %p230, %s24, 1
        %p232 = scmp.lt.s32.totalorder %s229, 11
        %s233 = scalar_select %p232, %s229, 11
        %p234 = scmp.lt.s32.totalorder %s26, 0
        %s235 = scalar_select %p234, %s26, 0
        %s236 = sadd.s32 %s235, %s233
        %s237 = smul.addr %s231, 12
        %s238 = sadd.s32 %s236, %s237
        %s239 = smul.addr %s238, 4
        %s240 = scalar_lea.vmem %s2, %s239
        %s241 = smul.u32 4, %s25
        %v243 = vld [vmem:[%s187] sm:$0xff]
        %v244 = vpack.c.bf16 %v243, %v243
        %v245 = vld [vmem:[%s196] sm:$0xf]
        %v246 = vld [vmem:[%s196 + $0x4] sm:$0xf]
        %v247 = vld [vmem:[%s196 + $0x8] sm:$0xf]
        %v248 = vld [vmem:[%s196 + $0xc] sm:$0xf]
        %v253 = vunpack.c.l.b16 %v245
        %v254 = vunpack.c.l.b16 %v246
        %v255 = vunpack.c.l.b16 %v247
        %v256 = vunpack.c.l.b16 %v248
        %v257 = vpack.c.b16 %v254, %v253
        %v258 = vpack.c.b16 %v256, %v255
        %vm261 = vcmask 261120
        %v263 = vsel %vm261, %v244, 0
        %265 = vmatprep.subr.bf16.mxu0 0
        %266 = vmatpush1.bf16.msra.mxu0 0
        %267 = vmatprep.subr.bf16.mxu0 0
        %268 = vmatpush1.bf16.msra.mxu0 0
        %269 = vmatprep.subr.bf16.mxu0 0
        %270 = vmatpush1.bf16.msra.mxu0 0
        %271 = vmatprep.subr.bf16.mxu0 0
        %272 = vmatpush1.bf16.msra.mxu0 0
        %273 = vmatprep.subr.bf16.mxu0 0
        %274 = vmatpush1.bf16.msra.mxu0 0
        %275 = vmatprep.subr.bf16.mxu0 0
        %276 = vmatpush1.bf16.msra.mxu0 0
        %277 = vmatprep.subr.bf16.mxu0 0
        %278 = vmatpush1.bf16.msra.mxu0 %v258
        %279 = vmatprep.subr.bf16.mxu0 0
        %280 = vmatpush1.bf16.msra.mxu0 %v257
        %281 = vmatprep.subr.bf16.mxu0 0
        %282 = vmatpush2.bf16.msra.mxu0 0
        %283 = vmatprep.subr.bf16.mxu0 0
        %284 = vmatpush2.bf16.msra.mxu0 0
        %285 = vmatprep.subr.bf16.mxu0 0
        %286 = vmatpush2.bf16.msra.mxu0 0
        %287 = vmatprep.subr.bf16.mxu0 0
        %288 = vmatpush2.bf16.msra.mxu0 0
        %289 = vmatprep.subr.bf16.mxu0 0
        %290 = vmatpush2.bf16.msra.mxu0 0
        %291 = vmatprep.subr.bf16.mxu0 0
        %292 = vmatpush2.bf16.msra.mxu0 0
        %293 = vmatprep.subr.bf16.mxu0 0
        %294 = vmatpush2.bf16.msra.mxu0 0
        %295 = vmatprep.subr.bf16.mxu0 0
        %296 = vmatpush2.bf16.msra.mxu0 0
        %297 = vmatprep.mubr.bf16.mxu0 0
        %298 = vmatmul.mubr.bf16.gmra.mxu0 %v263
        %v299 = vpop.f32.mrf.mxu0
        %v300 = vadd.f32 0.0, %v299
        %v301 = vpop.f32.mrf.mxu0
        %v302 = vpop.f32.mrf.mxu0
        %v303 = vpop.f32.mrf.mxu0
        %304 = vdwg.mxu0
        %v305 = vpack.c.bf16 %v300, %v300
        %vm306 = vcmask 60416
        %307 = vst.msk [vmem:[%s240] sm:$0xf] %vm306, %v305
        %v309 = vunpack.c.l.b16 %v305
        %v310 = vpack.c.b16 %v309, %v309
        %311 = vrot.lane.b32.xlu0 %v310, 120
        %v312 = vpop.permute.xlu0 %311
        %s314 = scalar_lea.vmem %s240, 4
        %315 = vst.msk [vmem:[%s314] sm:$0xf] %vm306, %v312
        %316 = vrot.lane.b32.xlu0 %v310, 112
        %v317 = vpop.permute.xlu0 %316
        %s319 = scalar_lea.vmem %s240, 8
        %320 = vst.msk [vmem:[%s319] sm:$0xf] %vm306, %v317
        %321 = vrot.lane.b32.xlu0 %v310, 104
        %v322 = vpop.permute.xlu0 %321
        %s324 = scalar_lea.vmem %s240, 12
        %325 = vst.msk [vmem:[%s324] sm:$0xf] %vm306, %v322
        %s326 = smul.u32 4, %s25
        %p327 = scmp.lt.s32.totalorder %s24, 1
        %s328 = scalar_select %p327, %s24, 1
        %p329 = scmp.lt.s32.totalorder %s326, 11
        %s330 = scalar_select %p329, %s326, 11
        %p331 = scmp.lt.s32.totalorder %s26, 0
        %s332 = scalar_select %p331, %s26, 0
        %s333 = sadd.s32 %s332, %s330
        %s334 = smul.addr %s328, 12
        %s335 = sadd.s32 %s333, %s334
        %s336 = smul.addr %s335, 4
        %s337 = scalar_lea.vmem %s2, %s336
        // Predicated region
        $region37: #{gpt_neo_self_attention.3} parent=27 // pred_check
          %p338 = pneg %p114
        $region38: #{gpt_neo_self_attention.3} parent=27 // pred_check_branch
          %340 = sbr.rel (%p338) target = $region40
        $region39: #{gpt_neo_self_attention.3} parent=27 // pred_region
          %s341 = smul.u32 4, %s25
        $region40: #{gpt_neo_self_attention.3} parent=27 // pred_fallthru
          _
      $region28: #{gpt_neo_self_attention.3} parent=5 // pred_fallthru
        _
      %p342 = scmp.le.s32.totalorder 2, %s14
      // Predicated region
      $region41: #{gpt_neo_self_attention.3} parent=5 // pred_check
        %p343 = pneg %p342
      $region42: #{gpt_neo_self_attention.3} parent=5 // pred_check_branch
        %345 = sbr.rel (%p343) target = $region44
      $region43: #{gpt_neo_self_attention.3} parent=5 // pred_region
        %s346 = ssub.s32 %s14, 2
        // Predicated region
        $region45: #{gpt_neo_self_attention.3} parent=43 // pred_check
          %p347 = pneg %p120
        $region46: #{gpt_neo_self_attention.3} parent=43 // pred_check_branch
          %349 = sbr.rel (%p347) target = $region48
        $region47: #{gpt_neo_self_attention.3} parent=43 // pred_region
          %s350 = smul.u32 4, %s28
          %p351 = scmp.lt.s32.totalorder %s27, 1
          %s352 = scalar_select %p351, %s27, 1
          %p353 = scmp.lt.s32.totalorder %s350, 11
          %s354 = scalar_select %p353, %s350, 11
          %p355 = scmp.lt.s32.totalorder %s29, 0
          %s356 = scalar_select %p355, %s29, 0
          %s357 = sadd.s32 %s356, %s354
          %s358 = smul.addr %s352, 12
          %s359 = sadd.s32 %s357, %s358
          %s360 = smul.addr %s359, 4
          %s361 = scalar_lea.vmem %s2, %s360
        $region48: #{gpt_neo_self_attention.3} parent=43 // pred_fallthru
          _
      $region44: #{gpt_neo_self_attention.3} parent=5 // pred_fallthru
        _
    $region6: #{gpt_neo_self_attention.3} parent=1 // loop_footer
      %s18 = sadd.s32 1, %s14
    $region7: #{gpt_neo_self_attention.3} parent=1 // loop_footer_branch
      %13 = sbr.rel target = $region3
    $region8: #{gpt_neo_self_attention.3} parent=1 // loop_exit
      _
    %362 = vsyncpa [#allocation3], 1
    %s363 = scalar_lea.sflag [#allocation3], 1
    %364 = vsyncpa %s363, 1
    %365 = vsyncpa [#allocation5], 1
    %s366 = scalar_lea.sflag [#allocation5], 1
    %367 = vsyncpa %s366, 1

// kernel: gpt_neo_self_attention.5
$region0: #{gpt_neo_self_attention.5}
  #allocation0 [shape = 'u32[]', space=smem, size = 0x4, offset = 0x4, fixed_abs, tag = 'smem constant byte address 0x4 - core index']
  #allocation1 [shape = 'u32[144,128]{1,0:T(1,128)}', space=vmem, size = 0x12000, scoped, tag = 'internal scratch']
  #allocation2 [shape = 'f32[8,32]{1,0:T(8,128)}', space=vmem, size = 0x1000, scoped, tag = 'scratch operand']
  %s0 = inlined_call_operand.vmem [shape: bf16[2,4,8,8], index: 0, kind: input, shape index: {}]
  %s1 = inlined_call_operand.vmem [shape: bf16[4,8,32], index: 1, kind: input, shape index: {}]
  %s2 = inlined_call_operand.vmem [shape: f32[1,32], index: 2, kind: input, shape index: {}]
  %s3 = inlined_call_operand.hbm [shape: f32[2,8,32], index: 3, kind: output, shape index: {}]
  %s4 = sld [smem:[#allocation0]]
  $region53: #{gpt_neo_self_attention.5} parent=0
    _
  %s6 = ssub.s32 1, %s4
  %s7 = scalar_select 0, %s6, %s4
  $region1: #{gpt_neo_self_attention.5} parent=0
    #allocation3 [shape = 'u8[8192]{0}', space=vmem, size = 0x2000, scoped, tag = 'output window, operand 0']
    #allocation4 [shape = 's32[2]{0}', space=sflag, size = 0x8, scoped, tag = 'scoped memory for gpt_neo_self_attention.5']
    %8 = vsyncpa [#allocation4], 0
    %s9 = scalar_lea.sflag [#allocation4], 1
    %10 = vsyncpa %s9, 0
    loop: start=0, step=1, limit=10
    $region2: #{gpt_neo_self_attention.5} parent=1 // loop_pre_header
      _
    $region3: #{gpt_neo_self_attention.5} parent=1 // loop_header
      %s12 = sphi 0, %s16
      %p13 = scmp.ge.s32.totalorder %s12, 10
      %s19 = sphi 0, %s38
      %s20 = sphi 0, %s34
      %s21 = sphi 0, %s30
      %s22 = sphi 0, %s19
      %s23 = sphi 0, %s20
      %s24 = sphi 0, %s21
      %s25 = sphi 0, %s22
      %s26 = sphi 0, %s23
      %s27 = sphi 0, %s24
      %s45 = sphi 0, %s47
      %s48 = sphi 0, %s45
      %s49 = sphi 0, %s48
      %s65 = sphi 0, %s49
      %s71 = sphi 0, %s73
      %s74 = sphi 0, %s71
      %s75 = sphi 0, %s74
      %s91 = sphi 0, %s75
      %s95 = sphi 0, %s95
      %s97 = sphi 0, %s95
      %s98 = sphi 0, %s97
      %s112 = sphi 0, %s98
      %s120 = sphi 0, %s122
      %s123 = sphi 0, %s120
      %s124 = sphi 0, %s123
      %s140 = sphi 0, %s124
    $region4: #{gpt_neo_self_attention.5} parent=1 // loop_header_branch
      %15 = sbr.rel (%p13) target = $region8
    $region5: #{gpt_neo_self_attention.5} parent=1 // loop_body
      %s17 = ssub.s32 %s12, 1
      %s18 = ssub.s32 %s12, 2
      %s28 = sadd.s32 1, %s21
      %p29 = scmp.ge.s32.totalorder %s28, 4
      %s30 = scalar_select %p29, 0, %s28
      %s31 = sadd.s32 1, %s20
      %s32 = scalar_select %p29, %s31, %s20
      %p33 = scmp.ge.s32.totalorder %s32, 1
      %s34 = scalar_select %p33, 0, %s32
      %s35 = sadd.s32 1, %s19
      %s36 = scalar_select %p33, %s35, %s19
      %p37 = scmp.ge.s32.totalorder %s36, 2
      %s38 = scalar_select %p37, 0, %s36
      %s39 = ssub.s32 %s19, %s38
      %s40 = ssub.s32 %s21, %s30
      %s41 = sor.u32 %s39, %s40
      %s42 = ssub.s32 %s20, %s34
      %s43 = sor.u32 %s41, %s42
      %p44 = scmp.eq.s32.totalorder %s43, 0
      %s46 = sadd.s32 %s45, 1
      %s47 = scalar_select %p44, %s45, %s46
      %p50 = pneg %p44
      %p51 = scmp.eq.s32.totalorder %s12, 7
      %p52 = por %p50, %p51
      %p53 = scmp.ne.s32.totalorder %s45, %s48
      %p54 = scmp.eq.s32.totalorder %s12, 0
      %p55 = por %p53, %p54
      %p56 = scmp.ne.s32.totalorder %s45, %s48
      %p57 = scmp.eq.s32.totalorder %s17, 7
      %p58 = por %p56, %p57
      %p59 = scmp.ne.s32.totalorder %s48, %s49
      %p60 = scmp.eq.s32.totalorder %s17, 0
      %p61 = por %p59, %p60
      %p62 = scmp.ne.s32.totalorder %s48, %s49
      %p63 = scmp.eq.s32.totalorder %s18, 7
      %p64 = por %p62, %p63
      %p66 = scmp.ne.s32.totalorder %s49, %s65
      %p67 = scmp.eq.s32.totalorder %s18, 0
      %p68 = por %p66, %p67
      %s69 = ssub.s32 %s21, %s30
      %p70 = scmp.eq.s32.totalorder %s69, 0
      %s72 = sadd.s32 %s71, 1
      %s73 = scalar_select %p70, %s71, %s72
      %p76 = pneg %p70
      %p77 = scmp.eq.s32.totalorder %s12, 7
      %p78 = por %p76, %p77
      %p79 = scmp.ne.s32.totalorder %s71, %s74
      %p80 = scmp.eq.s32.totalorder %s12, 0
      %p81 = por %p79, %p80
      %p82 = scmp.ne.s32.totalorder %s71, %s74
      %p83 = scmp.eq.s32.totalorder %s17, 7
      %p84 = por %p82, %p83
      %p85 = scmp.ne.s32.totalorder %s74, %s75
      %p86 = scmp.eq.s32.totalorder %s17, 0
      %p87 = por %p85, %p86
      %p88 = scmp.ne.s32.totalorder %s74, %s75
      %p89 = scmp.eq.s32.totalorder %s18, 7
      %p90 = por %p88, %p89
      %p92 = scmp.ne.s32.totalorder %s75, %s91
      %p93 = scmp.eq.s32.totalorder %s18, 0
      %p94 = por %p92, %p93
      %s96 = sadd.s32 %s95, 1
      %p99 = scmp.eq.s32.totalorder %s12, 7
      %p100 = scmp.ne.s32.totalorder %s95, %s97
      %p101 = scmp.eq.s32.totalorder %s12, 0
      %p102 = por %p100, %p101
      %p103 = scmp.ne.s32.totalorder %s95, %s97
      %p104 = scmp.eq.s32.totalorder %s17, 7
      %p105 = por %p103, %p104
      %p106 = scmp.ne.s32.totalorder %s97, %s98
      %p107 = scmp.eq.s32.totalorder %s17, 0
      %p108 = por %p106, %p107
      %p109 = scmp.ne.s32.totalorder %s97, %s98
      %p110 = scmp.eq.s32.totalorder %s18, 7
      %p111 = por %p109, %p110
      %p113 = scmp.ne.s32.totalorder %s98, %s112
      %p114 = scmp.eq.s32.totalorder %s18, 0
      %p115 = por %p113, %p114
      %s116 = ssub.s32 %s19, %s38
      %s117 = ssub.s32 %s20, %s34
      %s118 = sor.u32 %s116, %s117
      %p119 = scmp.eq.s32.totalorder %s118, 0
      %s121 = sadd.s32 %s120, 1
      %s122 = scalar_select %p119, %s120, %s121
      %p125 = pneg %p119
      %p126 = scmp.eq.s32.totalorder %s12, 7
      %p127 = por %p125, %p126
      %p128 = scmp.ne.s32.totalorder %s120, %s123
      %p129 = scmp.eq.s32.totalorder %s12, 0
      %p130 = por %p128, %p129
      %p131 = scmp.ne.s32.totalorder %s120, %s123
      %p132 = scmp.eq.s32.totalorder %s17, 7
      %p133 = por %p131, %p132
      %p134 = scmp.ne.s32.totalorder %s123, %s124
      %p135 = scmp.eq.s32.totalorder %s17, 0
      %p136 = por %p134, %p135
      %p137 = scmp.ne.s32.totalorder %s123, %s124
      %p138 = scmp.eq.s32.totalorder %s18, 7
      %p139 = por %p137, %p138
      %p141 = scmp.ne.s32.totalorder %s124, %s140
      %p142 = scmp.eq.s32.totalorder %s18, 0
      %p143 = por %p141, %p142
      %p144 = scmp.le.s32.totalorder 1, %s12
      %p145 = scmp.lt.s32.totalorder %s12, 9
      %p146 = pnand %p144, %p145
      %p147 = pneg %p146
      // Predicated region
      $region9: #{gpt_neo_self_attention.5} parent=5 // pred_check
        _
      $region10: #{gpt_neo_self_attention.5} parent=5 // pred_check_branch
        %149 = sbr.rel (%p146) target = $region12
      $region11: #{gpt_neo_self_attention.5} parent=5 // pred_region
        %s150 = ssub.s32 %s12, 1
        // Predicated region
        $region13: #{gpt_neo_self_attention.5} parent=11 // pred_check
          %p151 = pneg %p108
        $region14: #{gpt_neo_self_attention.5} parent=11 // pred_check_branch
          %153 = sbr.rel (%p151) target = $region16
        $region15: #{gpt_neo_self_attention.5} parent=11 // pred_region
          _
        $region16: #{gpt_neo_self_attention.5} parent=11 // pred_fallthru
          _
      $region12: #{gpt_neo_self_attention.5} parent=5 // pred_fallthru
        _
      %p154 = scmp.lt.s32.totalorder %s12, 8
      // Predicated region
      $region17: #{gpt_neo_self_attention.5} parent=5 // pred_check
        %p155 = pneg %p154
      $region18: #{gpt_neo_self_attention.5} parent=5 // pred_check_branch
        %157 = sbr.rel (%p155) target = $region20
      $region19: #{gpt_neo_self_attention.5} parent=5 // pred_region
        // Predicated region
        $region21: #{gpt_neo_self_attention.5} parent=19 // pred_check
          %p158 = pneg %p55
        $region22: #{gpt_neo_self_attention.5} parent=19 // pred_check_branch
          %160 = sbr.rel (%p158) target = $region24
        $region23: #{gpt_neo_self_attention.5} parent=19 // pred_region
          %p161 = scmp.lt.s32.totalorder %s19, 1
          %s162 = scalar_select %p161, %s19, 1
          %p163 = scmp.lt.s32.totalorder %s21, 3
          %s164 = scalar_select %p163, %s21, 3
          %p165 = scmp.lt.s32.totalorder %s20, 0
          %s166 = scalar_select %p165, %s20, 0
          %s167 = sadd.s32 %s166, %s164
          %s168 = smul.addr %s162, 4
          %s169 = sadd.s32 %s167, %s168
          %s170 = smul.addr %s169, 4
          %s171 = scalar_lea.vmem %s0, %s170
        $region24: #{gpt_neo_self_attention.5} parent=19 // pred_fallthru
          _
        // Predicated region
        $region25: #{gpt_neo_self_attention.5} parent=19 // pred_check
          %p172 = pneg %p81
        $region26: #{gpt_neo_self_attention.5} parent=19 // pred_check_branch
          %174 = sbr.rel (%p172) target = $region28
        $region27: #{gpt_neo_self_attention.5} parent=19 // pred_region
          %p175 = scmp.lt.s32.totalorder %s21, 3
          %s176 = scalar_select %p175, %s21, 3
          %s177 = smul.addr %s176, 4
          %s178 = scalar_lea.vmem %s1, %s177
        $region28: #{gpt_neo_self_attention.5} parent=19 // pred_fallthru
          _
      $region20: #{gpt_neo_self_attention.5} parent=5 // pred_fallthru
        _
      %p179 = scmp.le.s32.totalorder 1, %s12
      %p180 = scmp.lt.s32.totalorder %s12, 9
      %p181 = pnand %p179, %p180
      %p182 = pneg %p181
      // Predicated region
      $region29: #{gpt_neo_self_attention.5} parent=5 // pred_check
        _
      $region30: #{gpt_neo_self_attention.5} parent=5 // pred_check_branch
        %184 = sbr.rel (%p181) target = $region32
      $region31: #{gpt_neo_self_attention.5} parent=5 // pred_region
        %s185 = ssub.s32 %s12, 1
        %p186 = scmp.lt.s32.totalorder %s22, 1
        %s187 = scalar_select %p186, %s22, 1
        %p188 = scmp.lt.s32.totalorder %s24, 3
        %s189 = scalar_select %p188, %s24, 3
        %p190 = scmp.lt.s32.totalorder %s23, 0
        %s191 = scalar_select %p190, %s23, 0
        %s192 = sadd.s32 %s191, %s189
        %s193 = smul.addr %s187, 4
        %s194 = sadd.s32 %s192, %s193
        %s195 = smul.addr %s194, 4
        %s196 = scalar_lea.vmem %s0, %s195
        %p197 = pneg %p61
        %p198 = pneg %p58
        %p199 = scmp.lt.s32.totalorder %s24, 3
        %s200 = scalar_select %p199, %s24, 3
        %s201 = smul.addr %s200, 4
        %s202 = scalar_lea.vmem %s1, %s201
        %p203 = pneg %p87
        %p204 = pneg %p84
        %p205 = pneg %p108
        %p206 = pneg %p105
        %p207 = pneg %p136
        %p208 = pneg %p133
        %s209 = sand.u32 %s123, 1
        %s210 = scalar_lea.sflag [#allocation4], %s209
        %s211 = sand.u32 %s123, 1
        %s212 = smul.addr %s211, 8
        %s213 = scalar_lea.vmem [#allocation3], %s212
        %p214 = scmp.lt.s32.totalorder %s22, 1
        %s215 = scalar_select %p214, %s22, 1
        %p216 = scmp.lt.s32.totalorder %s24, 3
        %s217 = scalar_select %p216, %s24, 3
        %p218 = scmp.lt.s32.totalorder %s23, 0
        %s219 = scalar_select %p218, %s23, 0
        %s220 = sadd.s32 %s219, %s217
        %s221 = smul.addr %s215, 4
        %s222 = sadd.s32 %s220, %s221
        %s223 = smul.addr %s222, 4
        %s224 = scalar_lea.vmem %s0, %s223
        %p225 = scmp.lt.s32.totalorder %s24, 3
        %s226 = scalar_select %p225, %s24, 3
        %s227 = smul.addr %s226, 4
        %s228 = scalar_lea.vmem %s1, %s227
        %p230 = scmp.eq.s32.totalorder %s24, 0
        // Predicated region
        $region33: #{gpt_neo_self_attention.5} parent=31 // pred_check
          %p231 = pneg %p230
        $region34: #{gpt_neo_self_attention.5} parent=31 // pred_check_branch
          %233 = sbr.rel (%p231) target = $region36
        $region35: #{gpt_neo_self_attention.5} parent=31 // pred_region
          %vm234 = vcmask 261120
          %235 = vst.msk [vmem:[#allocation2] sm:$0xff] %vm234, 0.0
        $region36: #{gpt_neo_self_attention.5} parent=31 // pred_fallthru
          _
        %v236 = vld [vmem:[#allocation2] sm:$0xff]
        %v237 = vld [vmem:[%s224] sm:$0xf]
        %v238 = vld [vmem:[%s228] sm:$0xf]
        %vm239 = vcmask 64512
        %v241 = vsel %vm239, %v237, 0
        %vm243 = vcmask 1043456
        %v245 = vsel %vm243, %v238, 0
        %247 = vmatprep.subr.bf16.mxu0 0
        %248 = vmatpush1.bf16.msra.mxu0 0
        %249 = vmatprep.subr.bf16.mxu0 0
        %250 = vmatpush1.bf16.msra.mxu0 0
        %251 = vmatprep.subr.bf16.mxu0 0
        %252 = vmatpush1.bf16.msra.mxu0 0
        %253 = vmatprep.subr.bf16.mxu0 0
        %254 = vmatpush1.bf16.msra.mxu0 0
        %255 = vmatprep.subr.bf16.mxu0 0
        %256 = vmatpush1.bf16.msra.mxu0 0
        %257 = vmatprep.subr.bf16.mxu0 0
        %258 = vmatpush1.bf16.msra.mxu0 0
        %259 = vmatprep.subr.bf16.mxu0 0
        %260 = vmatpush1.bf16.msra.mxu0 0
        %261 = vmatprep.subr.bf16.mxu0 0
        %262 = vmatpush1.bf16.msra.mxu0 %v245
        %263 = vmatprep.subr.bf16.mxu0 0
        %264 = vmatpush2.bf16.msra.mxu0 0
        %265 = vmatprep.subr.bf16.mxu0 0
        %266 = vmatpush2.bf16.msra.mxu0 0
        %267 = vmatprep.subr.bf16.mxu0 0
        %268 = vmatpush2.bf16.msra.mxu0 0
        %269 = vmatprep.subr.bf16.mxu0 0
        %270 = vmatpush2.bf16.msra.mxu0 0
        %271 = vmatprep.subr.bf16.mxu0 0
        %272 = vmatpush2.bf16.msra.mxu0 0
        %273 = vmatprep.subr.bf16.mxu0 0
        %274 = vmatpush2.bf16.msra.mxu0 0
        %275 = vmatprep.subr.bf16.mxu0 0
        %276 = vmatpush2.bf16.msra.mxu0 0
        %277 = vmatprep.subr.bf16.mxu0 0
        %278 = vmatpush2.bf16.msra.mxu0 0
        %279 = vmatprep.mubr.bf16.mxu0 0
        %280 = vmatmul.mubr.bf16.gmra.mxu0 %v241
        %v281 = vpop.f32.mrf.mxu0
        %v282 = vadd.f32 0.0, %v281
        %v283 = vpop.f32.mrf.mxu0
        %v284 = vpop.f32.mrf.mxu0
        %v285 = vpop.f32.mrf.mxu0
        %286 = vdwg.mxu0
        %v287 = vadd.f32 %v236, %v282
        %vm288 = vcmask 261120
        %289 = vst.msk [vmem:[#allocation2] sm:$0xff] %vm288, %v287
        %p290 = scmp.eq.s32.totalorder %s24, 3
        // Predicated region
        $region37: #{gpt_neo_self_attention.5} parent=31 // pred_check
          %p291 = pneg %p290
        $region38: #{gpt_neo_self_attention.5} parent=31 // pred_check_branch
          %293 = sbr.rel (%p291) target = $region40
        $region39: #{gpt_neo_self_attention.5} parent=31 // pred_region
          %v294 = vld [vmem:[#allocation2] sm:$0xff]
          %v295 = vld [vmem:[%s2] sm:$0x1]
          %v297 = vlaneseq
          %v298 = vshrl.u32 %v297, 7
          %v299 = vsub.s32 0, %v298
          %v300 = vrot.slane %v295, %v299
          %v302 = vadd.f32 %v294, %v300
          %303 = vst.msk [vmem:[%s213] sm:$0xff] %vm288, %v302
        $region40: #{gpt_neo_self_attention.5} parent=31 // pred_fallthru
          _
        %s304 = sand.u32 %s123, 1
        %s305 = scalar_lea.sflag [#allocation4], %s304
        %s306 = sand.u32 %s123, 1
        %s307 = smul.addr %s306, 8
        %s308 = scalar_lea.vmem [#allocation3], %s307
        // Predicated region
        $region41: #{gpt_neo_self_attention.5} parent=31 // pred_check
          %p309 = pneg %p133
        $region42: #{gpt_neo_self_attention.5} parent=31 // pred_check_branch
          %311 = sbr.rel (%p309) target = $region44
        $region43: #{gpt_neo_self_attention.5} parent=31 // pred_region
          %s313 = ssub.s32 128, 128
          %314 = vsyncadd %s305, %s313
          %s315 = sadd.s32 %s23, %s22
          %s316 = smul.addr %s315, 128
          %s317 = scalar_lea.hbm %s3, %s316
          %s319 = sshll.u32 %s308, 4
          %s320 = int_to_ptr.vmem [resolvable:$true] %s319
          %322 = dma.vmem_to_hbm [thread:$0]  %s320, 128, %s317, %s305
        $region44: #{gpt_neo_self_attention.5} parent=31 // pred_fallthru
          _
      $region32: #{gpt_neo_self_attention.5} parent=5 // pred_fallthru
        _
      %p323 = scmp.le.s32.totalorder 2, %s12
      // Predicated region
      $region45: #{gpt_neo_self_attention.5} parent=5 // pred_check
        %p324 = pneg %p323
      $region46: #{gpt_neo_self_attention.5} parent=5 // pred_check_branch
        %326 = sbr.rel (%p324) target = $region48
      $region47: #{gpt_neo_self_attention.5} parent=5 // pred_region
        %s327 = ssub.s32 %s12, 2
        // Predicated region
        $region49: #{gpt_neo_self_attention.5} parent=47 // pred_check
          %p328 = pneg %p139
        $region50: #{gpt_neo_self_attention.5} parent=47 // pred_check_branch
          %330 = sbr.rel (%p328) target = $region52
        $region51: #{gpt_neo_self_attention.5} parent=47 // pred_region
          %s331 = sand.u32 %s124, 1
          %s332 = scalar_lea.sflag [#allocation4], %s331
          %s333 = sand.u32 %s124, 1
          %s334 = smul.addr %s333, 8
          %s335 = scalar_lea.vmem [#allocation3], %s334
          %336 = dma.done %s332, 128
        $region52: #{gpt_neo_self_attention.5} parent=47 // pred_fallthru
          _
      $region48: #{gpt_neo_self_attention.5} parent=5 // pred_fallthru
        _
    $region6: #{gpt_neo_self_attention.5} parent=1 // loop_footer
      %s16 = sadd.s32 1, %s12
    $region7: #{gpt_neo_self_attention.5} parent=1 // loop_footer_branch
      %11 = sbr.rel target = $region3
    $region8: #{gpt_neo_self_attention.5} parent=1 // loop_exit
      _
    %337 = vsyncpa [#allocation4], 1
    %s338 = scalar_lea.sflag [#allocation4], 1
    %339 = vsyncpa %s338, 1

// kernel: gpt_neo_self_attention.4
$region0: #{gpt_neo_self_attention.4}
  #allocation0 [shape = 'u32[]', space=smem, size = 0x4, offset = 0x4, fixed_abs, tag = 'smem constant byte address 0x4 - core index']
  #allocation1 [shape = 'u32[144,128]{1,0:T(1,128)}', space=vmem, size = 0x12000, scoped, tag = 'internal scratch']
  #allocation2 [shape = 'f32[8,1]{1,0:T(8,128)}', space=vmem, size = 0x1000, scoped, tag = 'scratch operand']
  #allocation3 [shape = 'f32[8,1]{1,0:T(8,128)}', space=vmem, size = 0x1000, scoped, tag = 'scratch operand']
  #allocation4 [shape = 'f32[8,8]{1,0:T(8,128)}', space=vmem, size = 0x1000, scoped, tag = 'scratch operand']
  #allocation5 [shape = 's32[1]{0}', space=sflag, size = 0x4, scoped, tag = 'scoped memory for gpt_neo_self_attention.4']
  #allocation6 [shape = 's32[1]{0:T(128)S(6)}', space=smem, size = 0x200, scoped, tag = 'prefetched SMEM operand 0']
  #allocation7 [shape = 's32[1]{0:T(128)S(6)}', space=smem, size = 0x200, scoped, tag = 'prefetched SMEM operand 1']
  %s0 = inlined_call_operand.<no memory space> [shape: s32[1], index: 0, kind: input, shape index: {}, may-alias: {0,1}]
  %s1 = inlined_call_operand.<no memory space> [shape: s32[1], index: 1, kind: input, shape index: {}, may-alias: {0,1}]
  %s2 = inlined_call_operand.vmem [shape: bf16[2,12,8,8], index: 2, kind: input, shape index: {}, may-alias: {2,3,4}]
  %s3 = inlined_call_operand.vmem [shape: bf16[2,12,8,8], index: 3, kind: input, shape index: {}, may-alias: {2,3,4}]
  %s4 = inlined_call_operand.vmem [shape: bf16[2,12,8,8], index: 4, kind: input, shape index: {}, may-alias: {2,3,4}]
  %s5 = inlined_call_operand.vmem [shape: bf16[2,4,8,8], index: 5, kind: output, shape index: {}]
  %s6 = sld [smem:[#allocation0]]
  $region57: #{gpt_neo_self_attention.4} parent=0
    _
  %s8 = ssub.s32 1, %s6
  %s9 = scalar_select 0, %s8, %s6
  %10 = sst [smem:[#allocation6]] %s0
  %11 = sst [smem:[#allocation7]] %s1
  loop: start=0, step=1, limit=10
  $region2: #{gpt_neo_self_attention.4} parent=0 // loop_pre_header
    _
  $region3: #{gpt_neo_self_attention.4} parent=0 // loop_header
    %s13 = sphi 0, %s17
    %p14 = scmp.ge.s32.totalorder %s13, 10
    %s20 = sphi 0, %s39
    %s21 = sphi 0, %s35
    %s22 = sphi 0, %s31
    %s23 = sphi 0, %s20
    %s24 = sphi 0, %s21
    %s25 = sphi 0, %s22
    %s26 = sphi 0, %s23
    %s27 = sphi 0, %s24
    %s28 = sphi 0, %s25
    %s48 = sphi 0, %s50
    %s51 = sphi 0, %s48
    %s52 = sphi 0, %s51
    %s68 = sphi 0, %s52
    %s82 = sphi 0, %s84
    %s85 = sphi 0, %s82
    %s86 = sphi 0, %s85
    %s102 = sphi 0, %s86
    %s116 = sphi 0, %s118
    %s119 = sphi 0, %s116
    %s120 = sphi 0, %s119
    %s136 = sphi 0, %s120
    %s148 = sphi 0, %s150
    %s151 = sphi 0, %s148
    %s152 = sphi 0, %s151
    %s168 = sphi 0, %s152
  $region4: #{gpt_neo_self_attention.4} parent=0 // loop_header_branch
    %16 = sbr.rel (%p14) target = $region8
  $region5: #{gpt_neo_self_attention.4} parent=0 // loop_body
    %s18 = ssub.s32 %s13, 1
    %s19 = ssub.s32 %s13, 2
    %s29 = sadd.s32 1, %s22
    %p30 = scmp.ge.s32.totalorder %s29, 1
    %s31 = scalar_select %p30, 0, %s29
    %s32 = sadd.s32 1, %s21
    %s33 = scalar_select %p30, %s32, %s21
    %p34 = scmp.ge.s32.totalorder %s33, 4
    %s35 = scalar_select %p34, 0, %s33
    %s36 = sadd.s32 1, %s20
    %s37 = scalar_select %p34, %s36, %s20
    %p38 = scmp.ge.s32.totalorder %s37, 2
    %s39 = scalar_select %p38, 0, %s37
    %s40 = sld [smem:[#allocation6 + %s22]]
    %s41 = sld [smem:[#allocation6 + %s31]]
    %s42 = ssub.s32 %s20, %s39
    %s43 = ssub.s32 %s21, %s35
    %s44 = sor.u32 %s42, %s43
    %s45 = ssub.s32 %s40, %s41
    %s46 = sor.u32 %s44, %s45
    %p47 = scmp.eq.s32.totalorder %s46, 0
    %s49 = sadd.s32 %s48, 1
    %s50 = scalar_select %p47, %s48, %s49
    %p53 = pneg %p47
    %p54 = scmp.eq.s32.totalorder %s13, 7
    %p55 = por %p53, %p54
    %p56 = scmp.ne.s32.totalorder %s48, %s51
    %p57 = scmp.eq.s32.totalorder %s13, 0
    %p58 = por %p56, %p57
    %p59 = scmp.ne.s32.totalorder %s48, %s51
    %p60 = scmp.eq.s32.totalorder %s18, 7
    %p61 = por %p59, %p60
    %p62 = scmp.ne.s32.totalorder %s51, %s52
    %p63 = scmp.eq.s32.totalorder %s18, 0
    %p64 = por %p62, %p63
    %p65 = scmp.ne.s32.totalorder %s51, %s52
    %p66 = scmp.eq.s32.totalorder %s19, 7
    %p67 = por %p65, %p66
    %p69 = scmp.ne.s32.totalorder %s52, %s68
    %p70 = scmp.eq.s32.totalorder %s19, 0
    %p71 = por %p69, %p70
    %s72 = sadd.s32 %s21, 4
    %s73 = sld [smem:[#allocation7 + %s22]]
    %s74 = sadd.s32 %s35, 4
    %s75 = sld [smem:[#allocation7 + %s31]]
    %s76 = ssub.s32 %s20, %s39
    %s77 = ssub.s32 %s72, %s74
    %s78 = sor.u32 %s76, %s77
    %s79 = ssub.s32 %s73, %s75
    %s80 = sor.u32 %s78, %s79
    %p81 = scmp.eq.s32.totalorder %s80, 0
    %s83 = sadd.s32 %s82, 1
    %s84 = scalar_select %p81, %s82, %s83
    %p87 = pneg %p81
    %p88 = scmp.eq.s32.totalorder %s13, 7
    %p89 = por %p87, %p88
    %p90 = scmp.ne.s32.totalorder %s82, %s85
    %p91 = scmp.eq.s32.totalorder %s13, 0
    %p92 = por %p90, %p91
    %p93 = scmp.ne.s32.totalorder %s82, %s85
    %p94 = scmp.eq.s32.totalorder %s18, 7
    %p95 = por %p93, %p94
    %p96 = scmp.ne.s32.totalorder %s85, %s86
    %p97 = scmp.eq.s32.totalorder %s18, 0
    %p98 = por %p96, %p97
    %p99 = scmp.ne.s32.totalorder %s85, %s86
    %p100 = scmp.eq.s32.totalorder %s19, 7
    %p101 = por %p99, %p100
    %p103 = scmp.ne.s32.totalorder %s86, %s102
    %p104 = scmp.eq.s32.totalorder %s19, 0
    %p105 = por %p103, %p104
    %s106 = sadd.s32 %s21, 8
    %s107 = sld [smem:[#allocation7 + %s22]]
    %s108 = sadd.s32 %s35, 8
    %s109 = sld [smem:[#allocation7 + %s31]]
    %s110 = ssub.s32 %s20, %s39
    %s111 = ssub.s32 %s106, %s108
    %s112 = sor.u32 %s110, %s111
    %s113 = ssub.s32 %s107, %s109
    %s114 = sor.u32 %s112, %s113
    %p115 = scmp.eq.s32.totalorder %s114, 0
    %s117 = sadd.s32 %s116, 1
    %s118 = scalar_select %p115, %s116, %s117
    %p121 = pneg %p115
    %p122 = scmp.eq.s32.totalorder %s13, 7
    %p123 = por %p121, %p122
    %p124 = scmp.ne.s32.totalorder %s116, %s119
    %p125 = scmp.eq.s32.totalorder %s13, 0
    %p126 = por %p124, %p125
    %p127 = scmp.ne.s32.totalorder %s116, %s119
    %p128 = scmp.eq.s32.totalorder %s18, 7
    %p129 = por %p127, %p128
    %p130 = scmp.ne.s32.totalorder %s119, %s120
    %p131 = scmp.eq.s32.totalorder %s18, 0
    %p132 = por %p130, %p131
    %p133 = scmp.ne.s32.totalorder %s119, %s120
    %p134 = scmp.eq.s32.totalorder %s19, 7
    %p135 = por %p133, %p134
    %p137 = scmp.ne.s32.totalorder %s120, %s136
    %p138 = scmp.eq.s32.totalorder %s19, 0
    %p139 = por %p137, %p138
    %s140 = sld [smem:[#allocation6 + %s22]]
    %s141 = sld [smem:[#allocation6 + %s31]]
    %s142 = ssub.s32 %s20, %s39
    %s143 = ssub.s32 %s21, %s35
    %s144 = sor.u32 %s142, %s143
    %s145 = ssub.s32 %s140, %s141
    %s146 = sor.u32 %s144, %s145
    %p147 = scmp.eq.s32.totalorder %s146, 0
    %s149 = sadd.s32 %s148, 1
    %s150 = scalar_select %p147, %s148, %s149
    %p153 = pneg %p147
    %p154 = scmp.eq.s32.totalorder %s13, 7
    %p155 = por %p153, %p154
    %p156 = scmp.ne.s32.totalorder %s148, %s151
    %p157 = scmp.eq.s32.totalorder %s13, 0
    %p158 = por %p156, %p157
    %p159 = scmp.ne.s32.totalorder %s148, %s151
    %p160 = scmp.eq.s32.totalorder %s18, 7
    %p161 = por %p159, %p160
    %p162 = scmp.ne.s32.totalorder %s151, %s152
    %p163 = scmp.eq.s32.totalorder %s18, 0
    %p164 = por %p162, %p163
    %p165 = scmp.ne.s32.totalorder %s151, %s152
    %p166 = scmp.eq.s32.totalorder %s19, 7
    %p167 = por %p165, %p166
    %p169 = scmp.ne.s32.totalorder %s152, %s168
    %p170 = scmp.eq.s32.totalorder %s19, 0
    %p171 = por %p169, %p170
    %p172 = scmp.le.s32.totalorder 1, %s13
    %p173 = scmp.lt.s32.totalorder %s13, 9
    %p174 = pnand %p172, %p173
    %p175 = pneg %p174
    // Predicated region
    $region9: #{gpt_neo_self_attention.4} parent=5 // pred_check
      _
    $region10: #{gpt_neo_self_attention.4} parent=5 // pred_check_branch
      %177 = sbr.rel (%p174) target = $region12
    $region11: #{gpt_neo_self_attention.4} parent=5 // pred_region
      %s178 = ssub.s32 %s13, 1
    $region12: #{gpt_neo_self_attention.4} parent=5 // pred_fallthru
      _
    %p179 = scmp.lt.s32.totalorder %s13, 8
    // Predicated region
    $region13: #{gpt_neo_self_attention.4} parent=5 // pred_check
      %p180 = pneg %p179
    $region14: #{gpt_neo_self_attention.4} parent=5 // pred_check_branch
      %182 = sbr.rel (%p180) target = $region16
    $region15: #{gpt_neo_self_attention.4} parent=5 // pred_region
      // Predicated region
      $region17: #{gpt_neo_self_attention.4} parent=15 // pred_check
        %p183 = pneg %p58
      $region18: #{gpt_neo_self_attention.4} parent=15 // pred_check_branch
        %185 = sbr.rel (%p183) target = $region20
      $region19: #{gpt_neo_self_attention.4} parent=15 // pred_region
        %s186 = sld [smem:[#allocation6 + %s22]]
        %p187 = scmp.lt.s32.totalorder %s20, 1
        %s188 = scalar_select %p187, %s20, 1
        %p189 = scmp.lt.s32.totalorder %s21, 11
        %s190 = scalar_select %p189, %s21, 11
        %p191 = scmp.lt.s32.totalorder %s186, 0
        %s192 = scalar_select %p191, %s186, 0
        %s193 = sadd.s32 %s192, %s190
        %s194 = smul.addr %s188, 12
        %s195 = sadd.s32 %s193, %s194
        %s196 = smul.addr %s195, 4
        %s197 = scalar_lea.vmem %s2, %s196
        %s198 = sld [smem:[#allocation6 + %s22]]
      $region20: #{gpt_neo_self_attention.4} parent=15 // pred_fallthru
        _
      // Predicated region
      $region21: #{gpt_neo_self_attention.4} parent=15 // pred_check
        %p199 = pneg %p92
      $region22: #{gpt_neo_self_attention.4} parent=15 // pred_check_branch
        %201 = sbr.rel (%p199) target = $region24
      $region23: #{gpt_neo_self_attention.4} parent=15 // pred_region
        %s202 = sadd.s32 %s21, 4
        %s203 = sld [smem:[#allocation7 + %s22]]
        %p204 = scmp.lt.s32.totalorder %s20, 1
        %s205 = scalar_select %p204, %s20, 1
        %p206 = scmp.lt.s32.totalorder %s202, 11
        %s207 = scalar_select %p206, %s202, 11
        %p208 = scmp.lt.s32.totalorder %s203, 0
        %s209 = scalar_select %p208, %s203, 0
        %s210 = sadd.s32 %s209, %s207
        %s211 = smul.addr %s205, 12
        %s212 = sadd.s32 %s210, %s211
        %s213 = smul.addr %s212, 4
        %s214 = scalar_lea.vmem %s3, %s213
        %s215 = sadd.s32 %s21, 4
        %s216 = sld [smem:[#allocation7 + %s22]]
      $region24: #{gpt_neo_self_attention.4} parent=15 // pred_fallthru
        _
      // Predicated region
      $region25: #{gpt_neo_self_attention.4} parent=15 // pred_check
        %p217 = pneg %p126
      $region26: #{gpt_neo_self_attention.4} parent=15 // pred_check_branch
        %219 = sbr.rel (%p217) target = $region28
      $region27: #{gpt_neo_self_attention.4} parent=15 // pred_region
        %s220 = sadd.s32 %s21, 8
        %s221 = sld [smem:[#allocation7 + %s22]]
        %p222 = scmp.lt.s32.totalorder %s20, 1
        %s223 = scalar_select %p222, %s20, 1
        %p224 = scmp.lt.s32.totalorder %s220, 11
        %s225 = scalar_select %p224, %s220, 11
        %p226 = scmp.lt.s32.totalorder %s221, 0
        %s227 = scalar_select %p226, %s221, 0
        %s228 = sadd.s32 %s227, %s225
        %s229 = smul.addr %s223, 12
        %s230 = sadd.s32 %s228, %s229
        %s231 = smul.addr %s230, 4
        %s232 = scalar_lea.vmem %s4, %s231
        %s233 = sadd.s32 %s21, 8
        %s234 = sld [smem:[#allocation7 + %s22]]
      $region28: #{gpt_neo_self_attention.4} parent=15 // pred_fallthru
        _
    $region16: #{gpt_neo_self_attention.4} parent=5 // pred_fallthru
      _
    %p235 = scmp.le.s32.totalorder 1, %s13
    %p236 = scmp.lt.s32.totalorder %s13, 9
    %p237 = pnand %p235, %p236
    %p238 = pneg %p237
    // Predicated region
    $region29: #{gpt_neo_self_attention.4} parent=5 // pred_check
      _
    $region30: #{gpt_neo_self_attention.4} parent=5 // pred_check_branch
      %240 = sbr.rel (%p237) target = $region32
    $region31: #{gpt_neo_self_attention.4} parent=5 // pred_region
      %s241 = ssub.s32 %s13, 1
      %s242 = sld [smem:[#allocation6 + %s25]]
      %p243 = scmp.lt.s32.totalorder %s23, 1
      %s244 = scalar_select %p243, %s23, 1
      %p245 = scmp.lt.s32.totalorder %s24, 11
      %s246 = scalar_select %p245, %s24, 11
      %p247 = scmp.lt.s32.totalorder %s242, 0
      %s248 = scalar_select %p247, %s242, 0
      %s249 = sadd.s32 %s248, %s246
      %s250 = smul.addr %s244, 12
      %s251 = sadd.s32 %s249, %s250
      %s252 = smul.addr %s251, 4
      %s253 = scalar_lea.vmem %s2, %s252
      %p254 = pneg %p64
      %p255 = pneg %p61
      %s256 = sadd.s32 %s24, 4
      %s257 = sld [smem:[#allocation7 + %s25]]
      %p258 = scmp.lt.s32.totalorder %s23, 1
      %s259 = scalar_select %p258, %s23, 1
      %p260 = scmp.lt.s32.totalorder %s256, 11
      %s261 = scalar_select %p260, %s256, 11
      %p262 = scmp.lt.s32.totalorder %s257, 0
      %s263 = scalar_select %p262, %s257, 0
      %s264 = sadd.s32 %s263, %s261
      %s265 = smul.addr %s259, 12
      %s266 = sadd.s32 %s264, %s265
      %s267 = smul.addr %s266, 4
      %s268 = scalar_lea.vmem %s3, %s267
      %p269 = pneg %p98
      %p270 = pneg %p95
      %s271 = sadd.s32 %s24, 8
      %s272 = sld [smem:[#allocation7 + %s25]]
      %p273 = scmp.lt.s32.totalorder %s23, 1
      %s274 = scalar_select %p273, %s23, 1
      %p275 = scmp.lt.s32.totalorder %s271, 11
      %s276 = scalar_select %p275, %s271, 11
      %p277 = scmp.lt.s32.totalorder %s272, 0
      %s278 = scalar_select %p277, %s272, 0
      %s279 = sadd.s32 %s278, %s276
      %s280 = smul.addr %s274, 12
      %s281 = sadd.s32 %s279, %s280
      %s282 = smul.addr %s281, 4
      %s283 = scalar_lea.vmem %s4, %s282
      %p284 = pneg %p132
      %p285 = pneg %p129
      %p286 = pneg %p164
      %p287 = pneg %p161
      %s288 = sld [smem:[#allocation6 + %s25]]
      %p289 = scmp.lt.s32.totalorder %s23, 1
      %s290 = scalar_select %p289, %s23, 1
      %p291 = scmp.lt.s32.totalorder %s24, 3
      %s292 = scalar_select %p291, %s24, 3
      %p293 = scmp.lt.s32.totalorder %s288, 0
      %s294 = scalar_select %p293, %s288, 0
      %s295 = sadd.s32 %s294, %s292
      %s296 = smul.addr %s290, 4
      %s297 = sadd.s32 %s295, %s296
      %s298 = smul.addr %s297, 4
      %s299 = scalar_lea.vmem %s5, %s298
      %s300 = sld [smem:[#allocation6 + %s25]]
      %p301 = scmp.lt.s32.totalorder %s23, 1
      %s302 = scalar_select %p301, %s23, 1
      %p303 = scmp.lt.s32.totalorder %s24, 11
      %s304 = scalar_select %p303, %s24, 11
      %p305 = scmp.lt.s32.totalorder %s300, 0
      %s306 = scalar_select %p305, %s300, 0
      %s307 = sadd.s32 %s306, %s304
      %s308 = smul.addr %s302, 12
      %s309 = sadd.s32 %s307, %s308
      %s310 = smul.addr %s309, 4
      %s311 = scalar_lea.vmem %s2, %s310
      %s312 = sld [smem:[#allocation6 + %s25]]
      %s313 = sadd.s32 %s24, 4
      %s314 = sld [smem:[#allocation7 + %s25]]
      %p315 = scmp.lt.s32.totalorder %s23, 1
      %s316 = scalar_select %p315, %s23, 1
      %p317 = scmp.lt.s32.totalorder %s313, 11
      %s318 = scalar_select %p317, %s313, 11
      %p319 = scmp.lt.s32.totalorder %s314, 0
      %s320 = scalar_select %p319, %s314, 0
      %s321 = sadd.s32 %s320, %s318
      %s322 = smul.addr %s316, 12
      %s323 = sadd.s32 %s321, %s322
      %s324 = smul.addr %s323, 4
      %s325 = scalar_lea.vmem %s3, %s324
      %s326 = sadd.s32 %s24, 4
      %s327 = sld [smem:[#allocation7 + %s25]]
      %s328 = sadd.s32 %s24, 8
      %s329 = sld [smem:[#allocation7 + %s25]]
      %p330 = scmp.lt.s32.totalorder %s23, 1
      %s331 = scalar_select %p330, %s23, 1
      %p332 = scmp.lt.s32.totalorder %s328, 11
      %s333 = scalar_select %p332, %s328, 11
      %p334 = scmp.lt.s32.totalorder %s329, 0
      %s335 = scalar_select %p334, %s329, 0
      %s336 = sadd.s32 %s335, %s333
      %s337 = smul.addr %s331, 12
      %s338 = sadd.s32 %s336, %s337
      %s339 = smul.addr %s338, 4
      %s340 = scalar_lea.vmem %s4, %s339
      %s341 = sadd.s32 %s24, 8
      %s342 = sld [smem:[#allocation7 + %s25]]
      %s343 = sld [smem:[#allocation6 + %s25]]
      %p344 = scmp.lt.s32.totalorder %s23, 1
      %s345 = scalar_select %p344, %s23, 1
      %p346 = scmp.lt.s32.totalorder %s24, 3
      %s347 = scalar_select %p346, %s24, 3
      %p348 = scmp.lt.s32.totalorder %s343, 0
      %s349 = scalar_select %p348, %s343, 0
      %s350 = sadd.s32 %s349, %s347
      %s351 = smul.addr %s345, 4
      %s352 = sadd.s32 %s350, %s351
      %s353 = smul.addr %s352, 4
      %s354 = scalar_lea.vmem %s5, %s353
      %s355 = sld [smem:[#allocation6 + %s25]]
      %s357 = sld [smem:[#allocation6 + %s25]]
      %s358 = sld [smem:[#allocation7 + %s25]]
      %p359 = scmp.eq.s32.totalorder %s358, 0
      // Predicated region
      $region33: #{gpt_neo_self_attention.4} parent=31 // pred_check
        %p360 = pneg %p359
      $region34: #{gpt_neo_self_attention.4} parent=31 // pred_check_branch
        %362 = sbr.rel (%p360) target = $region36
      $region35: #{gpt_neo_self_attention.4} parent=31 // pred_region
        %vm363 = vcmask 7168
        %364 = vst.msk [vmem:[#allocation2] sm:$0xff] %vm363, -inf
        %365 = vst.msk [vmem:[#allocation3] sm:$0xff] %vm363, 0.0
        %vm366 = vcmask 64512
        %367 = vst.msk [vmem:[#allocation4] sm:$0xff] %vm366, 0.0
      $region36: #{gpt_neo_self_attention.4} parent=31 // pred_fallthru
        _
      %p368 = scmp.lt.s32.totalorder %s358, %s357
      // Predicated region
      $region37: #{gpt_neo_self_attention.4} parent=31 // pred_check
        %p369 = pneg %p368
      $region38: #{gpt_neo_self_attention.4} parent=31 // pred_check_branch
        %371 = sbr.rel (%p369) target = $region40
      $region39: #{gpt_neo_self_attention.4} parent=31 // pred_region
        %v372 = vld [vmem:[%s311] sm:$0xf]
        %v373 = vld [vmem:[%s325] sm:$0xf]
        %v374 = vld [vmem:[%s340] sm:$0xf]
        %vm375 = vcmask 64512
        %v377 = vsel %vm375, %v372, 0
        %v380 = vsel %vm375, %v373, 0
        %382 = vmatprep.subr.bf16.mxu0 0
        %383 = vmatpush1.bf16.xpose.msra.mxu0 0
        %384 = vmatprep.subr.bf16.mxu0 0
        %385 = vmatpush1.bf16.xpose.msra.mxu0 0
        %386 = vmatprep.subr.bf16.mxu0 0
        %387 = vmatpush1.bf16.xpose.msra.mxu0 0
        %388 = vmatprep.subr.bf16.mxu0 0
        %389 = vmatpush1.bf16.xpose.msra.mxu0 0
        %390 = vmatprep.subr.bf16.mxu0 0
        %391 = vmatpush1.bf16.xpose.msra.mxu0 0
        %392 = vmatprep.subr.bf16.mxu0 0
        %393 = vmatpush1.bf16.xpose.msra.mxu0 0
        %394 = vmatprep.subr.bf16.mxu0 0
        %395 = vmatpush1.bf16.xpose.msra.mxu0 0
        %396 = vmatprep.subr.bf16.mxu0 0
        %397 = vmatpush1.bf16.xpose.msra.mxu0 %v380
        %398 = vmatprep.subr.bf16.mxu0 0
        %399 = vmatpush2.bf16.xpose.msra.mxu0 0
        %400 = vmatprep.subr.bf16.mxu0 0
        %401 = vmatpush2.bf16.xpose.msra.mxu0 0
        %402 = vmatprep.subr.bf16.mxu0 0
        %403 = vmatpush2.bf16.xpose.msra.mxu0 0
        %404 = vmatprep.subr.bf16.mxu0 0
        %405 = vmatpush2.bf16.xpose.msra.mxu0 0
        %406 = vmatprep.subr.bf16.mxu0 0
        %407 = vmatpush2.bf16.xpose.msra.mxu0 0
        %408 = vmatprep.subr.bf16.mxu0 0
        %409 = vmatpush2.bf16.xpose.msra.mxu0 0
        %410 = vmatprep.subr.bf16.mxu0 0
        %411 = vmatpush2.bf16.xpose.msra.mxu0 0
        %412 = vmatprep.subr.bf16.mxu0 0
        %413 = vmatpush2.bf16.xpose.msra.mxu0 0
        %414 = vmatprep.mubr.bf16.mxu0 0
        %415 = vmatmul.mubr.bf16.gmra.mxu0 %v377
        %v416 = vpop.f32.mrf.mxu0
        %v417 = vadd.f32 0.0, %v416
        %v418 = vpop.f32.mrf.mxu0
        %v419 = vpop.f32.mrf.mxu0
        %v420 = vpop.f32.mrf.mxu0
        %421 = vdwg.mxu0
        %v422 = vld [vmem:[#allocation2] sm:$0xff]
        %v423 = vsel %vm375, %v417, -inf
        %424 = vmax.xlane.f32.xlu0 %v423
        %v425 = vpop.xlane.xlu0 %424
        %v426 = vmax.f32 %v422, %v425
        %v427 = vsub.f32 %v422, %v426
        %v428 = vmul.f32 %v427, 1.442695
        %v429 = vpow.pop %v428
        %431 = vset.pattern.permute.xlu0 0
        %432 = vperm.xlu0 %431, %v426
        %v433 = vpop.permute.xlu0 %432
        %v435 = vsub.f32 %v417, %v433
        %v436 = vmul.f32 %v435, 1.442695
        %v437 = vpow.pop %v436
        %v438 = vld [vmem:[#allocation3] sm:$0xff]
        %v439 = vmul.f32 %v429, %v438
        %v440 = vsel %vm375, %v437, 0.0
        %441 = vadd.xlane.f32.xlu0 %v440
        %v442 = vpop.xlane.xlu0 %441
        %v443 = vadd.f32 %v439, %v442
        %vm444 = vcmask 7168
        %445 = vst.msk [vmem:[#allocation3] sm:$0xff] %vm444, %v443
        %v446 = vld [vmem:[#allocation4] sm:$0xff]
        %448 = vset.pattern.permute.xlu0 0
        %449 = vperm.xlu0 %448, %v429
        %v450 = vpop.permute.xlu0 %449
        %v452 = vmul.f32 %v450, %v446
        %v453 = vpack.c.bf16 %v437, %v437
        %v455 = vsel %vm375, %v453, 0
        %vm457 = vcmask 1043456
        %v459 = vsel %vm457, %v374, 0
        %461 = vmatprep.subr.bf16.mxu0 0
        %462 = vmatpush1.bf16.msra.mxu0 0
        %463 = vmatprep.subr.bf16.mxu0 0
        %464 = vmatpush1.bf16.msra.mxu0 0
        %465 = vmatprep.subr.bf16.mxu0 0
        %466 = vmatpush1.bf16.msra.mxu0 0
        %467 = vmatprep.subr.bf16.mxu0 0
        %468 = vmatpush1.bf16.msra.mxu0 0
        %469 = vmatprep.subr.bf16.mxu0 0
        %470 = vmatpush1.bf16.msra.mxu0 0
        %471 = vmatprep.subr.bf16.mxu0 0
        %472 = vmatpush1.bf16.msra.mxu0 0
        %473 = vmatprep.subr.bf16.mxu0 0
        %474 = vmatpush1.bf16.msra.mxu0 0
        %475 = vmatprep.subr.bf16.mxu0 0
        %476 = vmatpush1.bf16.msra.mxu0 %v459
        %477 = vmatprep.subr.bf16.mxu0 0
        %478 = vmatpush2.bf16.msra.mxu0 0
        %479 = vmatprep.subr.bf16.mxu0 0
        %480 = vmatpush2.bf16.msra.mxu0 0
        %481 = vmatprep.subr.bf16.mxu0 0
        %482 = vmatpush2.bf16.msra.mxu0 0
        %483 = vmatprep.subr.bf16.mxu0 0
        %484 = vmatpush2.bf16.msra.mxu0 0
        %485 = vmatprep.subr.bf16.mxu0 0
        %486 = vmatpush2.bf16.msra.mxu0 0
        %487 = vmatprep.subr.bf16.mxu0 0
        %488 = vmatpush2.bf16.msra.mxu0 0
        %489 = vmatprep.subr.bf16.mxu0 0
        %490 = vmatpush2.bf16.msra.mxu0 0
        %491 = vmatprep.subr.bf16.mxu0 0
        %492 = vmatpush2.bf16.msra.mxu0 0
        %493 = vmatprep.mubr.bf16.mxu0 0
        %494 = vmatmul.mubr.bf16.gmra.mxu0 %v455
        %v495 = vpop.f32.mrf.mxu0
        %v496 = vadd.f32 0.0, %v495
        %v497 = vpop.f32.mrf.mxu0
        %v498 = vpop.f32.mrf.mxu0
        %v499 = vpop.f32.mrf.mxu0
        %500 = vdwg.mxu0
        %v501 = vadd.f32 %v452, %v496
        %502 = vst.msk [vmem:[#allocation4] sm:$0xff] %vm375, %v501
        %503 = vst.msk [vmem:[#allocation2] sm:$0xff] %vm444, %v426
      $region40: #{gpt_neo_self_attention.4} parent=31 // pred_fallthru
        _
      %p504 = scmp.eq.s32.totalorder %s358, %s357
      // Predicated region
      $region41: #{gpt_neo_self_attention.4} parent=31 // pred_check
        %p505 = pneg %p504
      $region42: #{gpt_neo_self_attention.4} parent=31 // pred_check_branch
        %507 = sbr.rel (%p505) target = $region44
      $region43: #{gpt_neo_self_attention.4} parent=31 // pred_region
        %v508 = vld [vmem:[%s311] sm:$0xf]
        %v509 = vld [vmem:[%s325] sm:$0xf]
        %v510 = vld [vmem:[%s340] sm:$0xf]
        %vm511 = vcmask 64512
        %v513 = vsel %vm511, %v508, 0
        %v516 = vsel %vm511, %v509, 0
        %518 = vmatprep.subr.bf16.mxu0 0
        %519 = vmatpush1.bf16.xpose.msra.mxu0 0
        %520 = vmatprep.subr.bf16.mxu0 0
        %521 = vmatpush1.bf16.xpose.msra.mxu0 0
        %522 = vmatprep.subr.bf16.mxu0 0
        %523 = vmatpush1.bf16.xpose.msra.mxu0 0
        %524 = vmatprep.subr.bf16.mxu0 0
        %525 = vmatpush1.bf16.xpose.msra.mxu0 0
        %526 = vmatprep.subr.bf16.mxu0 0
        %527 = vmatpush1.bf16.xpose.msra.mxu0 0
        %528 = vmatprep.subr.bf16.mxu0 0
        %529 = vmatpush1.bf16.xpose.msra.mxu0 0
        %530 = vmatprep.subr.bf16.mxu0 0
        %531 = vmatpush1.bf16.xpose.msra.mxu0 0
        %532 = vmatprep.subr.bf16.mxu0 0
        %533 = vmatpush1.bf16.xpose.msra.mxu0 %v516
        %534 = vmatprep.subr.bf16.mxu0 0
        %535 = vmatpush2.bf16.xpose.msra.mxu0 0
        %536 = vmatprep.subr.bf16.mxu0 0
        %537 = vmatpush2.bf16.xpose.msra.mxu0 0
        %538 = vmatprep.subr.bf16.mxu0 0
        %539 = vmatpush2.bf16.xpose.msra.mxu0 0
        %540 = vmatprep.subr.bf16.mxu0 0
        %541 = vmatpush2.bf16.xpose.msra.mxu0 0
        %542 = vmatprep.subr.bf16.mxu0 0
        %543 = vmatpush2.bf16.xpose.msra.mxu0 0
        %544 = vmatprep.subr.bf16.mxu0 0
        %545 = vmatpush2.bf16.xpose.msra.mxu0 0
        %546 = vmatprep.subr.bf16.mxu0 0
        %547 = vmatpush2.bf16.xpose.msra.mxu0 0
        %548 = vmatprep.subr.bf16.mxu0 0
        %549 = vmatpush2.bf16.xpose.msra.mxu0 0
        %550 = vmatprep.mubr.bf16.mxu0 0
        %551 = vmatmul.mubr.bf16.gmra.mxu0 %v513
        %v552 = vpop.f32.mrf.mxu0
        %v553 = vadd.f32 0.0, %v552
        %v554 = vpop.f32.mrf.mxu0
        %v555 = vpop.f32.mrf.mxu0
        %v556 = vpop.f32.mrf.mxu0
        %557 = vdwg.mxu0
        %v558 = vlaneseq
        %v559 = vshrl.u32 %v558, 7
        %v560 = vlaneseq
        %v561 = vand.u32 %v560, 127
        %vm562 = vcmp.ge.s32.totalorder %v559, %v561
        %v563 = vsel %vm562, %v553, -3.4028235e+38
        %v564 = vld [vmem:[#allocation2] sm:$0xff]
        %v565 = vsel %vm511, %v563, -inf
        %566 = vmax.xlane.f32.xlu0 %v565
        %v567 = vpop.xlane.xlu0 %566
        %v568 = vmax.f32 %v564, %v567
        %v569 = vsub.f32 %v564, %v568
        %v570 = vmul.f32 %v569, 1.442695
        %v571 = vpow.pop %v570
        %573 = vset.pattern.permute.xlu0 0
        %574 = vperm.xlu0 %573, %v568
        %v575 = vpop.permute.xlu0 %574
        %v577 = vsub.f32 %v563, %v575
        %v578 = vmul.f32 %v577, 1.442695
        %v579 = vpow.pop %v578
        %v580 = vld [vmem:[#allocation3] sm:$0xff]
        %v581 = vmul.f32 %v571, %v580
        %v582 = vsel %vm511, %v579, 0.0
        %583 = vadd.xlane.f32.xlu0 %v582
        %v584 = vpop.xlane.xlu0 %583
        %v585 = vadd.f32 %v581, %v584
        %vm586 = vcmask 7168
        %587 = vst.msk [vmem:[#allocation3] sm:$0xff] %vm586, %v585
        %v588 = vld [vmem:[#allocation4] sm:$0xff]
        %590 = vset.pattern.permute.xlu0 0
        %591 = vperm.xlu0 %590, %v571
        %v592 = vpop.permute.xlu0 %591
        %v594 = vmul.f32 %v592, %v588
        %v595 = vpack.c.bf16 %v579, %v579
        %v597 = vsel %vm511, %v595, 0
        %vm599 = vcmask 1043456
        %v601 = vsel %vm599, %v510, 0
        %603 = vmatprep.subr.bf16.mxu0 0
        %604 = vmatpush1.bf16.msra.mxu0 0
        %605 = vmatprep.subr.bf16.mxu0 0
        %606 = vmatpush1.bf16.msra.mxu0 0
        %607 = vmatprep.subr.bf16.mxu0 0
        %608 = vmatpush1.bf16.msra.mxu0 0
        %609 = vmatprep.subr.bf16.mxu0 0
        %610 = vmatpush1.bf16.msra.mxu0 0
        %611 = vmatprep.subr.bf16.mxu0 0
        %612 = vmatpush1.bf16.msra.mxu0 0
        %613 = vmatprep.subr.bf16.mxu0 0
        %614 = vmatpush1.bf16.msra.mxu0 0
        %615 = vmatprep.subr.bf16.mxu0 0
        %616 = vmatpush1.bf16.msra.mxu0 0
        %617 = vmatprep.subr.bf16.mxu0 0
        %618 = vmatpush1.bf16.msra.mxu0 %v601
        %619 = vmatprep.subr.bf16.mxu0 0
        %620 = vmatpush2.bf16.msra.mxu0 0
        %621 = vmatprep.subr.bf16.mxu0 0
        %622 = vmatpush2.bf16.msra.mxu0 0
        %623 = vmatprep.subr.bf16.mxu0 0
        %624 = vmatpush2.bf16.msra.mxu0 0
        %625 = vmatprep.subr.bf16.mxu0 0
        %626 = vmatpush2.bf16.msra.mxu0 0
        %627 = vmatprep.subr.bf16.mxu0 0
        %628 = vmatpush2.bf16.msra.mxu0 0
        %629 = vmatprep.subr.bf16.mxu0 0
        %630 = vmatpush2.bf16.msra.mxu0 0
        %631 = vmatprep.subr.bf16.mxu0 0
        %632 = vmatpush2.bf16.msra.mxu0 0
        %633 = vmatprep.subr.bf16.mxu0 0
        %634 = vmatpush2.bf16.msra.mxu0 0
        %635 = vmatprep.mubr.bf16.mxu0 0
        %636 = vmatmul.mubr.bf16.gmra.mxu0 %v597
        %v637 = vpop.f32.mrf.mxu0
        %v638 = vadd.f32 0.0, %v637
        %v639 = vpop.f32.mrf.mxu0
        %v640 = vpop.f32.mrf.mxu0
        %v641 = vpop.f32.mrf.mxu0
        %642 = vdwg.mxu0
        %v643 = vadd.f32 %v594, %v638
        %644 = vst.msk [vmem:[#allocation4] sm:$0xff] %vm511, %v643
        %645 = vst.msk [vmem:[#allocation2] sm:$0xff] %vm586, %v568
        %v646 = vld [vmem:[#allocation3] sm:$0xff]
        %v647 = vrcp.pop %v646
        %v648 = vld [vmem:[#allocation4] sm:$0xff]
        %650 = vset.pattern.permute.xlu0 0
        %651 = vperm.xlu0 %650, %v647
        %v652 = vpop.permute.xlu0 %651
        %v654 = vmul.f32 %v648, %v652
        %v655 = vpack.c.bf16 %v654, %v654
        %vm656 = vcmask 60416
        %657 = vst.msk [vmem:[%s354] sm:$0xf] %vm656, %v655
      $region44: #{gpt_neo_self_attention.4} parent=31 // pred_fallthru
        _
      %s658 = sld [smem:[#allocation6 + %s25]]
      %p659 = scmp.lt.s32.totalorder %s23, 1
      %s660 = scalar_select %p659, %s23, 1
      %p661 = scmp.lt.s32.totalorder %s24, 3
      %s662 = scalar_select %p661, %s24, 3
      %p663 = scmp.lt.s32.totalorder %s658, 0
      %s664 = scalar_select %p663, %s658, 0
      %s665 = sadd.s32 %s664, %s662
      %s666 = smul.addr %s660, 4
      %s667 = sadd.s32 %s665, %s666
      %s668 = smul.addr %s667, 4
      %s669 = scalar_lea.vmem %s5, %s668
      // Predicated region
      $region45: #{gpt_neo_self_attention.4} parent=31 // pred_check
        %p670 = pneg %p161
      $region46: #{gpt_neo_self_attention.4} parent=31 // pred_check_branch
        %672 = sbr.rel (%p670) target = $region48
      $region47: #{gpt_neo_self_attention.4} parent=31 // pred_region
        %s673 = sld [smem:[#allocation6 + %s25]]
      $region48: #{gpt_neo_self_attention.4} parent=31 // pred_fallthru
        _
    $region32: #{gpt_neo_self_attention.4} parent=5 // pred_fallthru
      _
    %p674 = scmp.le.s32.totalorder 2, %s13
    // Predicated region
    $region49: #{gpt_neo_self_attention.4} parent=5 // pred_check
      %p675 = pneg %p674
    $region50: #{gpt_neo_self_attention.4} parent=5 // pred_check_branch
      %677 = sbr.rel (%p675) target = $region52
    $region51: #{gpt_neo_self_attention.4} parent=5 // pred_region
      %s678 = ssub.s32 %s13, 2
      // Predicated region
      $region53: #{gpt_neo_self_attention.4} parent=51 // pred_check
        %p679 = pneg %p167
      $region54: #{gpt_neo_self_attention.4} parent=51 // pred_check_branch
        %681 = sbr.rel (%p679) target = $region56
      $region55: #{gpt_neo_self_attention.4} parent=51 // pred_region
        %s682 = sld [smem:[#allocation6 + %s28]]
        %p683 = scmp.lt.s32.totalorder %s26, 1
        %s684 = scalar_select %p683, %s26, 1
        %p685 = scmp.lt.s32.totalorder %s27, 3
        %s686 = scalar_select %p685, %s27, 3
        %p687 = scmp.lt.s32.totalorder %s682, 0
        %s688 = scalar_select %p687, %s682, 0
        %s689 = sadd.s32 %s688, %s686
        %s690 = smul.addr %s684, 4
        %s691 = sadd.s32 %s689, %s690
        %s692 = smul.addr %s691, 4
        %s693 = scalar_lea.vmem %s5, %s692
      $region56: #{gpt_neo_self_attention.4} parent=51 // pred_fallthru
        _
    $region52: #{gpt_neo_self_attention.4} parent=5 // pred_fallthru
      _
  $region6: #{gpt_neo_self_attention.4} parent=0 // loop_footer
    %s17 = sadd.s32 1, %s13
  $region7: #{gpt_neo_self_attention.4} parent=0 // loop_footer_branch
    %12 = sbr.rel target = $region3
  $region8: #{gpt_neo_self_attention.4} parent=0 // loop_exit
    _

</llo_original>
